<compile_context>
chip_gen: v6e
topology: v6e:2x2x1
jax: 0.10.0
libtpu: 0.0.40
codegen_flags: <defaults>
</compile_context>

<pallas_src>
import numpy as np
import jax
import jax.numpy as jnp
from jax.experimental import pallas as pl
from jax.experimental.pallas import tpu as pltpu

_LANE = 128
_SUBLANE_BF16 = 16   # bf16 vregs pack (16, 128)


def _round_up(x, m):
    return ((x + m - 1) // m) * m


def _device_kind():
    try:
        return jax.devices()[0].device_kind.lower()
    except Exception:
        return ""


def _num_tensorcores():
    # v7x has 2 TensorCores per chip; v5e / v6e have 1.
    return 2 if "v7" in _device_kind() else 1


def _vmem_capacity_bytes():
    try:
        return int(pltpu.get_tpu_info().vmem_capacity_bytes)
    except Exception:
        return (64 << 20) if "v7" in _device_kind() else (128 << 20)


def _relation_encoder_kernel(x_ref, w1_ref, b1_ref, w2_ref, b2_ref,
                             w3_ref, b3_ref, o_ref):
    # x arrives in its natural dtype (f32) and is cast to the MXU compute
    # dtype in-kernel (cheaper than a wrapper-side bf16 copy of x in HBM).
    # Three MXU matmuls with f32 accumulation; bias add + ReLU in f32;
    # intermediates recast to bf16 for the next MXU pass.
    x = x_ref[...].astype(w1_ref.dtype)

    h = jnp.dot(x, w1_ref[...], preferred_element_type=jnp.float32)
    h = jnp.maximum(h + b1_ref[...], 0.0).astype(w2_ref.dtype)

    h = jnp.dot(h, w2_ref[...], preferred_element_type=jnp.float32)
    h = jnp.maximum(h + b2_ref[...], 0.0).astype(w3_ref.dtype)

    h = jnp.dot(h, w3_ref[...], preferred_element_type=jnp.float32)
    h = jnp.maximum(h + b3_ref[...], 0.0)

    o_ref[...] = h.astype(o_ref.dtype)


def prepare_params(params, *, compute_dtype=jnp.bfloat16):
    """One-time parameter prep (hoisted out of the hot path).

    Pads the hidden feature dim to a lane multiple (128), casts weights to the
    MXU compute dtype, and reshapes biases to (1, dim) float32.  The output
    feature dim is deliberately NOT padded (the kernel writes exact columns).
    """
    (w1, b1), (w2, b2), (w3, b3) = params
    input_size, hidden_size = w1.shape
    output_size = w3.shape[1]
    h_p = _round_up(hidden_size, _LANE)

    def pad_w(w, rows, cols):
        w = jnp.asarray(w)
        return jnp.pad(w, ((0, rows - w.shape[0]),
                           (0, cols - w.shape[1]))).astype(compute_dtype)

    def pad_b(b, cols):
        b2 = jnp.asarray(b).reshape(1, -1).astype(jnp.float32)
        return jnp.pad(b2, ((0, 0), (0, cols - b2.shape[1])))

    return (pad_w(w1, input_size, h_p), pad_b(b1, h_p),
            pad_w(w2, h_p, h_p),        pad_b(b2, h_p),
            pad_w(w3, h_p, output_size), pad_b(b3, output_size))


def relation_encoder(x, prepped_params, *, tm=1024):
    """x: [n_relations, input_size] -> [n_relations, output_size].

    `prepped_params` must come from `prepare_params` (called once, outside the
    hot path).
    """
    w1p, b1p, w2p, b2p, w3p, b3p = prepped_params
    n, input_size = x.shape
    assert w1p.shape[0] == input_size, "params do not match input_size"
    h_p = w1p.shape[1]
    output_size = w3p.shape[1]
    out_dtype = x.dtype
    c_bytes = w1p.dtype.itemsize
    x_bytes = x.dtype.itemsize
    o_bytes = jnp.dtype(out_dtype).itemsize

    # Row tile: multiple of 16 (bf16 sublane packing).  Split into >=2 grid
    # steps only on multi-TensorCore parts (v7x), where the "parallel" axis is
    # sharded across cores; on v5e/v6e a split only adds per-step overhead.
    tile = _SUBLANE_BF16
    tm_eff = max(tile, min(_round_up(tm, tile), _round_up(n, tile)))
    if _num_tensorcores() > 1 and n >= 2 * tile:
        tm_eff = min(tm_eff, _round_up(pl.cdiv(n, 2), tile))

    w_bytes = ((int(w1p.size) + int(w2p.size) + int(w3p.size)) * c_bytes
               + (int(b1p.size) + int(b2p.size) + int(b3p.size)) * 4)

    def vmem_estimate(rows, weight_bufs):
        step = rows * input_size * x_bytes + rows * output_size * o_bytes
        inter = rows * h_p * 4 * 3                  # live f32 intermediates
        return 2 * step + weight_bufs * w_bytes + inter

    vmem_cap = _vmem_capacity_bytes()
    budget = vmem_cap // 2
    while tm_eff > tile and vmem_estimate(tm_eff, 2) > budget:
        tm_eff = _round_up(tm_eff // 2, tile)

    grid = (int(pl.cdiv(n, tm_eff)),)

    # ~3/4 of physical VMEM as the ceiling (v5e/v6e: ~96 MiB, v7x: ~48 MiB),
    # but never ask for more than ~2x the estimate.
    vmem_est = vmem_estimate(tm_eff, 2)
    vmem_limit = int(min(vmem_cap * 3 // 4, max(32 << 20, 2 * vmem_est)))

    cost = pl.CostEstimate(
        flops=2 * n * (input_size * h_p + h_p * h_p + h_p * output_size),
        transcendentals=0,
        bytes_accessed=int(n * input_size * x_bytes + w_bytes
                           + n * output_size * o_bytes),
    )

    def build(single_buffer_weights):
        def resident(shape):
            # Constant index_map => never re-DMAs after step 0.  Buffered(1)
            # drops the pointless second buffer (matters for large hidden on
            # v7x's 64 MiB VMEM).
            if single_buffer_weights:
                return pl.BlockSpec(shape, lambda i: (0, 0),
                                    pipeline_mode=pl.Buffered(1))
            return pl.BlockSpec(shape, lambda i: (0, 0))

        in_specs = [
            pl.BlockSpec((tm_eff, input_size), lambda i: (i, 0)),  # x tile
            resident((input_size, h_p)),                           # w1
            resident((1, h_p)),                                    # b1
            resident((h_p, h_p)),                                  # w2
            resident((1, h_p)),                                    # b2
            resident((h_p, output_size)),                          # w3
            resident((1, output_size)),                            # b3
        ]
        return pl.pallas_call(
            _relation_encoder_kernel,
            out_shape=jax.ShapeDtypeStruct((n, output_size), out_dtype),
            grid_spec=pltpu.PrefetchScalarGridSpec(
                num_scalar_prefetch=0,
                grid=grid,
                in_specs=in_specs,
                out_specs=pl.BlockSpec((tm_eff, output_size), lambda i: (i, 0)),
            ),
            compiler_params=pltpu.CompilerParams(
                dimension_semantics=("parallel",),
                vmem_limit_bytes=vmem_limit,
            ),
            cost_estimate=cost,
        )

    try:
        return build(True)(x, w1p, b1p, w2p, b2p, w3p, b3p)
    except Exception:
        # Older JAX / Mosaic may not accept Buffered(1) on a top-level
        # pallas_call BlockSpec; fall back to default double-buffered weights.
        return build(False)(x, w1p, b1p, w2p, b2p, w3p, b3p)


def init_params(key, input_size, hidden_size, output_size):
    """nn.Linear-style init (uniform +-1/sqrt(fan_in)); weights stored as
    [in_features, out_features]."""
    ks = jax.random.split(key, 6)

    def linear(kw, kb, fan_in, fan_out):
        bound = 1.0 / np.sqrt(fan_in)
        w = jax.random.uniform(kw, (fan_in, fan_out), jnp.float32, -bound, bound)
        b = jax.random.uniform(kb, (1, fan_out), jnp.float32, -bound, bound)
        return w, b

    return (
        linear(ks[0], ks[1], input_size, hidden_size),
        linear(ks[2], ks[3], hidden_size, hidden_size),
        linear(ks[4], ks[5], hidden_size, output_size),
    )


def relation_encoder_ref(x, params):
    """Exact f32 reference (matches the PyTorch module)."""
    (w1, b1), (w2, b2), (w3, b3) = params
    h = jnp.maximum(x @ w1 + b1, 0.0)
    h = jnp.maximum(h @ w2 + b2, 0.0)
    h = jnp.maximum(h @ w3 + b3, 0.0)
    return h


def relation_encoder_ref_bf16(x, params):
    """Reference that emulates the kernel's bf16 activation round-trips with
    f32 accumulation (for a tight numerical comparison)."""
    (w1, b1), (w2, b2), (w3, b3) = params
    bf = jnp.bfloat16
    h = x.astype(bf)
    for (w, b), last in (((w1, b1), False), ((w2, b2), False), ((w3, b3), True)):
        h = jnp.maximum(
            jnp.dot(h, w.astype(bf), preferred_element_type=jnp.float32)
            + b.astype(jnp.float32), 0.0)
        if not last:
            h = h.astype(bf)
    return h.astype(x.dtype)


if __name__ == "__main__":
    key = jax.random.PRNGKey(0)
    k_x, k_p = jax.random.split(key)

    n_relations = 200     # ragged on purpose (not a multiple of the row tile)
    input_size = 16
    hidden_size = 32
    output_size = 32

    x = jax.random.normal(k_x, (n_relations, input_size), jnp.float32)
    params = init_params(k_p, input_size, hidden_size, output_size)
    prepped = prepare_params(params)        # one-time prep, outside hot path

    out = relation_encoder(x, prepped)
    out = jax.block_until_ready(out)
    assert out.shape == (n_relations, output_size)

    # Sanity vs. the exact f32 reference (bf16 activation error budget ~1%).
    ref_f32 = relation_encoder_ref(x, params)
    assert jnp.allclose(out, ref_f32, atol=1e-2, rtol=1e-2), \
        "mismatch vs f32 reference"

    # Tight check vs. a reference that emulates the kernel's bf16 round-trips.
    ref_bf16 = relation_encoder_ref_bf16(x, params)
    assert jnp.allclose(out, ref_bf16, atol=2e-3, rtol=2e-3), \
        "mismatch vs bf16-emulating reference"

    print("KERNEL_OK")
</pallas_src>

<mosaic_0001>
module attributes {stable_mosaic.version = 11 : i64} {
  func.func @_relation_encoder_kernel(%arg0: i32, %arg1: memref<208x16xf32, #tpu.memory_space<vmem>>, %arg2: memref<16x128xbf16, #tpu.memory_space<vmem>>, %arg3: memref<1x128xf32, #tpu.memory_space<vmem>>, %arg4: memref<128x128xbf16, #tpu.memory_space<vmem>>, %arg5: memref<1x128xf32, #tpu.memory_space<vmem>>, %arg6: memref<128x32xbf16, #tpu.memory_space<vmem>>, %arg7: memref<1x32xf32, #tpu.memory_space<vmem>>, %arg8: memref<208x32xf32, #tpu.memory_space<vmem>>) attributes {dimension_semantics = [#tpu.dimension_semantics<parallel>], iteration_bounds = array<i64: 1>, scalar_prefetch = 0 : i64, scratch_operands = 0 : i64, tpu.core_type = #tpu.core_type<tc>, window_params = [{transform_indices = @transform_0, window_bounds = array<i64: 208, 16>}, {pipeline_mode = #tpu.pipeline_mode<synchronous>, transform_indices = @transform_1, window_bounds = array<i64: 16, 128>}, {pipeline_mode = #tpu.pipeline_mode<synchronous>, transform_indices = @transform_2, window_bounds = array<i64: 1, 128>}, {pipeline_mode = #tpu.pipeline_mode<synchronous>, transform_indices = @transform_3, window_bounds = array<i64: 128, 128>}, {pipeline_mode = #tpu.pipeline_mode<synchronous>, transform_indices = @transform_4, window_bounds = array<i64: 1, 128>}, {pipeline_mode = #tpu.pipeline_mode<synchronous>, transform_indices = @transform_5, window_bounds = array<i64: 128, 32>}, {pipeline_mode = #tpu.pipeline_mode<synchronous>, transform_indices = @transform_6, window_bounds = array<i64: 1, 32>}, {transform_indices = @transform_7, window_bounds = array<i64: 208, 32>}]} {
    %c0 = arith.constant 0 : index
    %c0_0 = arith.constant 0 : index
    %0 = vector.load %arg1[%c0, %c0_0] : memref<208x16xf32, #tpu.memory_space<vmem>>, vector<208x16xf32>
    %1 = arith.truncf %0 : vector<208x16xf32> to vector<208x16xbf16>
    %c0_1 = arith.constant 0 : index
    %c0_2 = arith.constant 0 : index
    %2 = vector.load %arg2[%c0_1, %c0_2] : memref<16x128xbf16, #tpu.memory_space<vmem>>, vector<16x128xbf16>
    %cst = arith.constant dense<0.000000e+00> : vector<208x128xf32>
    %3 = tpu.matmul %1, %2, %cst {dimension_numbers = #tpu.dot_dimension_numbers<[1], [0], [0], [1], [0, 0, 1, 1], [], []>} : vector<208x16xbf16>, vector<16x128xbf16>, vector<208x128xf32> -> vector<208x128xf32>
    %c0_3 = arith.constant 0 : index
    %c0_4 = arith.constant 0 : index
    %4 = vector.load %arg3[%c0_3, %c0_4] : memref<1x128xf32, #tpu.memory_space<vmem>>, vector<1x128xf32>
    %5 = vector.broadcast %4 : vector<1x128xf32> to vector<208x128xf32>
    %6 = arith.addf %3, %5 : vector<208x128xf32>
    %cst_5 = arith.constant 0.000000e+00 : f32
    %7 = vector.broadcast %cst_5 : f32 to vector<208x128xf32>
    %8 = arith.maximumf %6, %7 : vector<208x128xf32>
    %9 = arith.truncf %8 : vector<208x128xf32> to vector<208x128xbf16>
    %c0_6 = arith.constant 0 : index
    %c0_7 = arith.constant 0 : index
    %10 = vector.load %arg4[%c0_6, %c0_7] : memref<128x128xbf16, #tpu.memory_space<vmem>>, vector<128x128xbf16>
    %cst_8 = arith.constant dense<0.000000e+00> : vector<208x128xf32>
    %11 = tpu.matmul %9, %10, %cst_8 {dimension_numbers = #tpu.dot_dimension_numbers<[1], [0], [0], [1], [0, 0, 1, 1], [], []>} : vector<208x128xbf16>, vector<128x128xbf16>, vector<208x128xf32> -> vector<208x128xf32>
    %c0_9 = arith.constant 0 : index
    %c0_10 = arith.constant 0 : index
    %12 = vector.load %arg5[%c0_9, %c0_10] : memref<1x128xf32, #tpu.memory_space<vmem>>, vector<1x128xf32>
    %13 = vector.broadcast %12 : vector<1x128xf32> to vector<208x128xf32>
    %14 = arith.addf %11, %13 : vector<208x128xf32>
    %cst_11 = arith.constant 0.000000e+00 : f32
    %15 = vector.broadcast %cst_11 : f32 to vector<208x128xf32>
    %16 = arith.maximumf %14, %15 : vector<208x128xf32>
    %17 = arith.truncf %16 : vector<208x128xf32> to vector<208x128xbf16>
    %c0_12 = arith.constant 0 : index
    %c0_13 = arith.constant 0 : index
    %18 = vector.load %arg6[%c0_12, %c0_13] : memref<128x32xbf16, #tpu.memory_space<vmem>>, vector<128x32xbf16>
    %cst_14 = arith.constant dense<0.000000e+00> : vector<208x32xf32>
    %19 = tpu.matmul %17, %18, %cst_14 {dimension_numbers = #tpu.dot_dimension_numbers<[1], [0], [0], [1], [0, 0, 1, 1], [], []>} : vector<208x128xbf16>, vector<128x32xbf16>, vector<208x32xf32> -> vector<208x32xf32>
    %c0_15 = arith.constant 0 : index
    %c0_16 = arith.constant 0 : index
    %20 = vector.load %arg7[%c0_15, %c0_16] : memref<1x32xf32, #tpu.memory_space<vmem>>, vector<1x32xf32>
    %21 = vector.broadcast %20 : vector<1x32xf32> to vector<208x32xf32>
    %22 = arith.addf %19, %21 : vector<208x32xf32>
    %cst_17 = arith.constant 0.000000e+00 : f32
    %23 = vector.broadcast %cst_17 : f32 to vector<208x32xf32>
    %24 = arith.maximumf %22, %23 : vector<208x32xf32>
    %c0_18 = arith.constant 0 : index
    %c0_19 = arith.constant 0 : index
    %25 = vector.load %arg8[%c0_18, %c0_19] : memref<208x32xf32, #tpu.memory_space<vmem>>, vector<208x32xf32>
    tpu.vector_store %arg8[%c0_18, %c0_19], %24 {strides = array<i32>} : memref<208x32xf32, #tpu.memory_space<vmem>>, vector<208x32xf32>,
    return
  }
  func.func @transform_0(%arg0: i32) -> (i32, i32) {
    %c0_i32 = arith.constant 0 : i32
    %c0_i32_0 = arith.constant 0 : i32
    return %arg0, %c0_i32 : i32, i32
  }
  func.func @transform_1(%arg0: i32) -> (i32, i32) {
    %c0_i32 = arith.constant 0 : i32
    %c0_i32_0 = arith.constant 0 : i32
    %c0_i32_1 = arith.constant 0 : i32
    return %c0_i32, %c0_i32_0 : i32, i32
  }
  func.func @transform_2(%arg0: i32) -> (i32, i32) {
    %c0_i32 = arith.constant 0 : i32
    %c0_i32_0 = arith.constant 0 : i32
    %c0_i32_1 = arith.constant 0 : i32
    return %c0_i32, %c0_i32_0 : i32, i32
  }
  func.func @transform_3(%arg0: i32) -> (i32, i32) {
    %c0_i32 = arith.constant 0 : i32
    %c0_i32_0 = arith.constant 0 : i32
    %c0_i32_1 = arith.constant 0 : i32
    return %c0_i32, %c0_i32_0 : i32, i32
  }
  func.func @transform_4(%arg0: i32) -> (i32, i32) {
    %c0_i32 = arith.constant 0 : i32
    %c0_i32_0 = arith.constant 0 : i32
    %c0_i32_1 = arith.constant 0 : i32
    return %c0_i32, %c0_i32_0 : i32, i32
  }
  func.func @transform_5(%arg0: i32) -> (i32, i32) {
    %c0_i32 = arith.constant 0 : i32
    %c0_i32_0 = arith.constant 0 : i32
    %c0_i32_1 = arith.constant 0 : i32
    return %c0_i32, %c0_i32_0 : i32, i32
  }
  func.func @transform_6(%arg0: i32) -> (i32, i32) {
    %c0_i32 = arith.constant 0 : i32
    %c0_i32_0 = arith.constant 0 : i32
    %c0_i32_1 = arith.constant 0 : i32
    return %c0_i32, %c0_i32_0 : i32, i32
  }
  func.func @transform_7(%arg0: i32) -> (i32, i32) {
    %c0_i32 = arith.constant 0 : i32
    %c0_i32_0 = arith.constant 0 : i32
    return %arg0, %c0_i32 : i32, i32
  }
}

module attributes {stable_mosaic.version = 11 : i64} {
  func.func @_relation_encoder_kernel(%arg0: i32, %arg1: memref<208x16xf32, #tpu.memory_space<vmem>>, %arg2: memref<16x128xbf16, #tpu.memory_space<vmem>>, %arg3: memref<1x128xf32, #tpu.memory_space<vmem>>, %arg4: memref<128x128xbf16, #tpu.memory_space<vmem>>, %arg5: memref<1x128xf32, #tpu.memory_space<vmem>>, %arg6: memref<128x32xbf16, #tpu.memory_space<vmem>>, %arg7: memref<1x32xf32, #tpu.memory_space<vmem>>, %arg8: memref<208x32xf32, #tpu.memory_space<vmem>>) attributes {dimension_semantics = [#tpu.dimension_semantics<parallel>], iteration_bounds = array<i64: 1>, scalar_prefetch = 0 : i64, scratch_operands = 0 : i64, tpu.core_type = #tpu.core_type<tc>, window_params = [{transform_indices = @transform_0, window_bounds = array<i64: 208, 16>}, {pipeline_mode = #tpu.pipeline_mode<synchronous>, transform_indices = @transform_1, window_bounds = array<i64: 16, 128>}, {pipeline_mode = #tpu.pipeline_mode<synchronous>, transform_indices = @transform_2, window_bounds = array<i64: 1, 128>}, {pipeline_mode = #tpu.pipeline_mode<synchronous>, transform_indices = @transform_3, window_bounds = array<i64: 128, 128>}, {pipeline_mode = #tpu.pipeline_mode<synchronous>, transform_indices = @transform_4, window_bounds = array<i64: 1, 128>}, {pipeline_mode = #tpu.pipeline_mode<synchronous>, transform_indices = @transform_5, window_bounds = array<i64: 128, 32>}, {pipeline_mode = #tpu.pipeline_mode<synchronous>, transform_indices = @transform_6, window_bounds = array<i64: 1, 32>}, {transform_indices = @transform_7, window_bounds = array<i64: 208, 32>}]} {
    %c0 = arith.constant 0 : index
    %c0_0 = arith.constant 0 : index
    %0 = vector.load %arg1[%c0, %c0_0] : memref<208x16xf32, #tpu.memory_space<vmem>>, vector<208x16xf32>
    %1 = arith.truncf %0 : vector<208x16xf32> to vector<208x16xbf16>
    %c0_1 = arith.constant 0 : index
    %c0_2 = arith.constant 0 : index
    %2 = vector.load %arg2[%c0_1, %c0_2] : memref<16x128xbf16, #tpu.memory_space<vmem>>, vector<16x128xbf16>
    %cst = arith.constant dense<0.000000e+00> : vector<208x128xf32>
    %3 = tpu.matmul %1, %2, %cst {dimension_numbers = #tpu.dot_dimension_numbers<[1], [0], [0], [1], [0, 0, 1, 1], [], []>} : vector<208x16xbf16>, vector<16x128xbf16>, vector<208x128xf32> -> vector<208x128xf32>
    %c0_3 = arith.constant 0 : index
    %c0_4 = arith.constant 0 : index
    %4 = vector.load %arg3[%c0_3, %c0_4] : memref<1x128xf32, #tpu.memory_space<vmem>>, vector<1x128xf32>
    %5 = vector.broadcast %4 : vector<1x128xf32> to vector<208x128xf32>
    %6 = arith.addf %3, %5 : vector<208x128xf32>
    %cst_5 = arith.constant 0.000000e+00 : f32
    %7 = vector.broadcast %cst_5 : f32 to vector<208x128xf32>
    %8 = arith.maximumf %6, %7 : vector<208x128xf32>
    %9 = arith.truncf %8 : vector<208x128xf32> to vector<208x128xbf16>
    %c0_6 = arith.constant 0 : index
    %c0_7 = arith.constant 0 : index
    %10 = vector.load %arg4[%c0_6, %c0_7] : memref<128x128xbf16, #tpu.memory_space<vmem>>, vector<128x128xbf16>
    %cst_8 = arith.constant dense<0.000000e+00> : vector<208x128xf32>
    %11 = tpu.matmul %9, %10, %cst_8 {dimension_numbers = #tpu.dot_dimension_numbers<[1], [0], [0], [1], [0, 0, 1, 1], [], []>} : vector<208x128xbf16>, vector<128x128xbf16>, vector<208x128xf32> -> vector<208x128xf32>
    %c0_9 = arith.constant 0 : index
    %c0_10 = arith.constant 0 : index
    %12 = vector.load %arg5[%c0_9, %c0_10] : memref<1x128xf32, #tpu.memory_space<vmem>>, vector<1x128xf32>
    %13 = vector.broadcast %12 : vector<1x128xf32> to vector<208x128xf32>
    %14 = arith.addf %11, %13 : vector<208x128xf32>
    %cst_11 = arith.constant 0.000000e+00 : f32
    %15 = vector.broadcast %cst_11 : f32 to vector<208x128xf32>
    %16 = arith.maximumf %14, %15 : vector<208x128xf32>
    %17 = arith.truncf %16 : vector<208x128xf32> to vector<208x128xbf16>
    %c0_12 = arith.constant 0 : index
    %c0_13 = arith.constant 0 : index
    %18 = vector.load %arg6[%c0_12, %c0_13] : memref<128x32xbf16, #tpu.memory_space<vmem>>, vector<128x32xbf16>
    %cst_14 = arith.constant dense<0.000000e+00> : vector<208x32xf32>
    %19 = tpu.matmul %17, %18, %cst_14 {dimension_numbers = #tpu.dot_dimension_numbers<[1], [0], [0], [1], [0, 0, 1, 1], [], []>} : vector<208x128xbf16>, vector<128x32xbf16>, vector<208x32xf32> -> vector<208x32xf32>
    %c0_15 = arith.constant 0 : index
    %c0_16 = arith.constant 0 : index
    %20 = vector.load %arg7[%c0_15, %c0_16] : memref<1x32xf32, #tpu.memory_space<vmem>>, vector<1x32xf32>
    %21 = vector.broadcast %20 : vector<1x32xf32> to vector<208x32xf32>
    %22 = arith.addf %19, %21 : vector<208x32xf32>
    %cst_17 = arith.constant 0.000000e+00 : f32
    %23 = vector.broadcast %cst_17 : f32 to vector<208x32xf32>
    %24 = arith.maximumf %22, %23 : vector<208x32xf32>
    %c0_18 = arith.constant 0 : index
    %c0_19 = arith.constant 0 : index
    %25 = vector.load %arg8[%c0_18, %c0_19] : memref<208x32xf32, #tpu.memory_space<vmem>>, vector<208x32xf32>
    tpu.vector_store %arg8[%c0_18, %c0_19], %24 {strides = array<i32>} : memref<208x32xf32, #tpu.memory_space<vmem>>, vector<208x32xf32>,
    return
  }
  func.func @transform_0(%arg0: i32) -> (i32, i32) {
    %c0_i32 = arith.constant 0 : i32
    %c0_i32_0 = arith.constant 0 : i32
    return %arg0, %c0_i32 : i32, i32
  }
  func.func @transform_1(%arg0: i32) -> (i32, i32) {
    %c0_i32 = arith.constant 0 : i32
    %c0_i32_0 = arith.constant 0 : i32
    %c0_i32_1 = arith.constant 0 : i32
    return %c0_i32, %c0_i32_0 : i32, i32
  }
  func.func @transform_2(%arg0: i32) -> (i32, i32) {
    %c0_i32 = arith.constant 0 : i32
    %c0_i32_0 = arith.constant 0 : i32
    %c0_i32_1 = arith.constant 0 : i32
    return %c0_i32, %c0_i32_0 : i32, i32
  }
  func.func @transform_3(%arg0: i32) -> (i32, i32) {
    %c0_i32 = arith.constant 0 : i32
    %c0_i32_0 = arith.constant 0 : i32
    %c0_i32_1 = arith.constant 0 : i32
    return %c0_i32, %c0_i32_0 : i32, i32
  }
  func.func @transform_4(%arg0: i32) -> (i32, i32) {
    %c0_i32 = arith.constant 0 : i32
    %c0_i32_0 = arith.constant 0 : i32
    %c0_i32_1 = arith.constant 0 : i32
    return %c0_i32, %c0_i32_0 : i32, i32
  }
  func.func @transform_5(%arg0: i32) -> (i32, i32) {
    %c0_i32 = arith.constant 0 : i32
    %c0_i32_0 = arith.constant 0 : i32
    %c0_i32_1 = arith.constant 0 : i32
    return %c0_i32, %c0_i32_0 : i32, i32
  }
  func.func @transform_6(%arg0: i32) -> (i32, i32) {
    %c0_i32 = arith.constant 0 : i32
    %c0_i32_0 = arith.constant 0 : i32
    %c0_i32_1 = arith.constant 0 : i32
    return %c0_i32, %c0_i32_0 : i32, i32
  }
  func.func @transform_7(%arg0: i32) -> (i32, i32) {
    %c0_i32 = arith.constant 0 : i32
    %c0_i32_0 = arith.constant 0 : i32
    return %arg0, %c0_i32 : i32, i32
  }
}

</mosaic_0001>

<llo_original>
// kernel: tpu_custom_call.1
$region0: #{tpu_custom_call.1}
  #allocation0 [shape = 'u32[]', space=smem, size = 0x4, offset = 0x4, fixed_abs, tag = 'smem constant byte address 0x4 - core index']
  #allocation1 [shape = 'u32[144,128]{1,0:T(1,128)}', space=vmem, size = 0x12000, scoped, tag = 'internal scratch']
  %s0 = inlined_call_operand.vmem [shape: f32[200,16], index: 0, kind: input, shape index: {}]
  %s1 = inlined_call_operand.vmem [shape: bf16[16,128], index: 1, kind: input, shape index: {}]
  %s2 = inlined_call_operand.vmem [shape: f32[1,128], index: 2, kind: input, shape index: {}]
  %s3 = inlined_call_operand.vmem [shape: bf16[128,128], index: 3, kind: input, shape index: {}]
  %s4 = inlined_call_operand.vmem [shape: f32[1,128], index: 4, kind: input, shape index: {}]
  %s5 = inlined_call_operand.vmem [shape: bf16[128,32], index: 5, kind: input, shape index: {}]
  %s6 = inlined_call_operand.vmem [shape: f32[1,32], index: 6, kind: input, shape index: {}]
  %s7 = inlined_call_operand.vmem [shape: f32[200,32], index: 7, kind: output, shape index: {}]
  %s8 = sld [smem:[#allocation0]]
  $region72: #{tpu_custom_call.1} parent=0
    _
  %s10 = ssub.s32 1, %s8
  %s11 = scalar_select 0, %s10, %s8
  $region1: #{tpu_custom_call.1} parent=0
    #allocation2 [shape = 'u8[106496]{0}', space=vmem, size = 0x1a000, scoped, tag = 'output window, operand 0, single buffered']
    // Predicated region
    $region2: #{tpu_custom_call.1} parent=1 // pred_check
      _
    $region3: #{tpu_custom_call.1} parent=1 // pred_check_branch
      %13 = sbr.rel (0) target = $region5
    $region4: #{tpu_custom_call.1} parent=1 // pred_region
      _
    $region5: #{tpu_custom_call.1} parent=1 // pred_fallthru
      _
    // Predicated region
    $region6: #{tpu_custom_call.1} parent=1 // pred_check
      _
    $region7: #{tpu_custom_call.1} parent=1 // pred_check_branch
      %15 = sbr.rel (0) target = $region9
    $region8: #{tpu_custom_call.1} parent=1 // pred_region
      _
    $region9: #{tpu_custom_call.1} parent=1 // pred_fallthru
      _
    // Predicated region
    $region10: #{tpu_custom_call.1} parent=1 // pred_check
      _
    $region11: #{tpu_custom_call.1} parent=1 // pred_check_branch
      %17 = sbr.rel (0) target = $region13
    $region12: #{tpu_custom_call.1} parent=1 // pred_region
      _
    $region13: #{tpu_custom_call.1} parent=1 // pred_fallthru
      _
    // Predicated region
    $region14: #{tpu_custom_call.1} parent=1 // pred_check
      _
    $region15: #{tpu_custom_call.1} parent=1 // pred_check_branch
      %19 = sbr.rel (0) target = $region17
    $region16: #{tpu_custom_call.1} parent=1 // pred_region
      _
    $region17: #{tpu_custom_call.1} parent=1 // pred_fallthru
      _
    // Predicated region
    $region18: #{tpu_custom_call.1} parent=1 // pred_check
      _
    $region19: #{tpu_custom_call.1} parent=1 // pred_check_branch
      %21 = sbr.rel (0) target = $region21
    $region20: #{tpu_custom_call.1} parent=1 // pred_region
      _
    $region21: #{tpu_custom_call.1} parent=1 // pred_fallthru
      _
    // Predicated region
    $region22: #{tpu_custom_call.1} parent=1 // pred_check
      _
    $region23: #{tpu_custom_call.1} parent=1 // pred_check_branch
      %23 = sbr.rel (0) target = $region25
    $region24: #{tpu_custom_call.1} parent=1 // pred_region
      _
    $region25: #{tpu_custom_call.1} parent=1 // pred_fallthru
      _
    // Predicated region
    $region26: #{tpu_custom_call.1} parent=1 // pred_check
      _
    $region27: #{tpu_custom_call.1} parent=1 // pred_check_branch
      %25 = sbr.rel (0) target = $region29
    $region28: #{tpu_custom_call.1} parent=1 // pred_region
      _
    $region29: #{tpu_custom_call.1} parent=1 // pred_fallthru
      _
    %v27 = vld [vmem:[%s0] sm:$0xff]
    %v28 = vld [vmem:[%s0 + $0x8] sm:$0xff]
    %v29 = vld [vmem:[%s0 + $0x10] sm:$0xff]
    %v30 = vld [vmem:[%s0 + $0x18] sm:$0xff]
    %v31 = vld [vmem:[%s0 + $0x20] sm:$0xff]
    %v32 = vld [vmem:[%s0 + $0x28] sm:$0xff]
    %v33 = vld [vmem:[%s0 + $0x30] sm:$0xff]
    %v34 = vld [vmem:[%s0 + $0x38] sm:$0xff]
    %v35 = vld [vmem:[%s0 + $0x40] sm:$0xff]
    %v36 = vld [vmem:[%s0 + $0x48] sm:$0xff]
    %v37 = vld [vmem:[%s0 + $0x50] sm:$0xff]
    %v38 = vld [vmem:[%s0 + $0x58] sm:$0xff]
    %v39 = vld [vmem:[%s0 + $0x60] sm:$0xff]
    %v40 = vld [vmem:[%s0 + $0x68] sm:$0xff]
    %v41 = vld [vmem:[%s0 + $0x70] sm:$0xff]
    %v42 = vld [vmem:[%s0 + $0x78] sm:$0xff]
    %v43 = vld [vmem:[%s0 + $0x80] sm:$0xff]
    %v44 = vld [vmem:[%s0 + $0x88] sm:$0xff]
    %v45 = vld [vmem:[%s0 + $0x90] sm:$0xff]
    %v46 = vld [vmem:[%s0 + $0x98] sm:$0xff]
    %v47 = vld [vmem:[%s0 + $0xa0] sm:$0xff]
    %v48 = vld [vmem:[%s0 + $0xa8] sm:$0xff]
    %v49 = vld [vmem:[%s0 + $0xb0] sm:$0xff]
    %v50 = vld [vmem:[%s0 + $0xb8] sm:$0xff]
    %v51 = vld [vmem:[%s0 + $0xc0] sm:$0xff]
    %v52 = vld [vmem:[%s0 + $0xc8] sm:$0xff]
    %v53 = vpack.c.bf16 %v28, %v27
    %v54 = vpack.c.bf16 %v30, %v29
    %v55 = vpack.c.bf16 %v32, %v31
    %v56 = vpack.c.bf16 %v34, %v33
    %v57 = vpack.c.bf16 %v36, %v35
    %v58 = vpack.c.bf16 %v38, %v37
    %v59 = vpack.c.bf16 %v40, %v39
    %v60 = vpack.c.bf16 %v42, %v41
    %v61 = vpack.c.bf16 %v44, %v43
    %v62 = vpack.c.bf16 %v46, %v45
    %v63 = vpack.c.bf16 %v48, %v47
    %v64 = vpack.c.bf16 %v50, %v49
    %v65 = vpack.c.bf16 %v52, %v51
    %v66 = vld [vmem:[%s1] sm:$0xf]
    %v67 = vld [vmem:[%s1 + $0x4] sm:$0xf]
    %v68 = vld [vmem:[%s2] sm:$0x1]
    %v70 = vlaneseq
    %v71 = vshrl.u32 %v70, 7
    %v72 = vsub.s32 0, %v71
    %v73 = vrot.slane %v68, %v72
    %v77 = vunpack.c.l.b16 %v66
    %v78 = vunpack.c.l.b16 %v67
    %v79 = vpack.c.b16 %v78, %v77
    %vm81 = vcmask 130048
    %v83 = vsel %vm81, %v53, 0
    %v86 = vsel %vm81, %v54, 0
    %v89 = vsel %vm81, %v55, 0
    %v92 = vsel %vm81, %v56, 0
    %v95 = vsel %vm81, %v57, 0
    %v98 = vsel %vm81, %v58, 0
    %v101 = vsel %vm81, %v59, 0
    %v104 = vsel %vm81, %v60, 0
    %v107 = vsel %vm81, %v61, 0
    %v110 = vsel %vm81, %v62, 0
    %v113 = vsel %vm81, %v63, 0
    %v116 = vsel %vm81, %v64, 0
    %v119 = vsel %vm81, %v65, 0
    %121 = vmatprep.subr.bf16.mxu0 0
    %122 = vmatpush1.bf16.msra.mxu0 0
    %123 = vmatprep.subr.bf16.mxu0 0
    %124 = vmatpush1.bf16.msra.mxu0 0
    %125 = vmatprep.subr.bf16.mxu0 0
    %126 = vmatpush1.bf16.msra.mxu0 0
    %127 = vmatprep.subr.bf16.mxu0 0
    %128 = vmatpush1.bf16.msra.mxu0 0
    %129 = vmatprep.subr.bf16.mxu0 0
    %130 = vmatpush1.bf16.msra.mxu0 0
    %131 = vmatprep.subr.bf16.mxu0 0
    %132 = vmatpush1.bf16.msra.mxu0 0
    %133 = vmatprep.subr.bf16.mxu0 0
    %134 = vmatpush1.bf16.msra.mxu0 0
    %135 = vmatprep.subr.bf16.mxu0 0
    %136 = vmatpush1.bf16.msra.mxu0 %v79
    %137 = vmatprep.subr.bf16.mxu0 0
    %138 = vmatpush2.bf16.msra.mxu0 0
    %139 = vmatprep.subr.bf16.mxu0 0
    %140 = vmatpush2.bf16.msra.mxu0 0
    %141 = vmatprep.subr.bf16.mxu0 0
    %142 = vmatpush2.bf16.msra.mxu0 0
    %143 = vmatprep.subr.bf16.mxu0 0
    %144 = vmatpush2.bf16.msra.mxu0 0
    %145 = vmatprep.subr.bf16.mxu0 0
    %146 = vmatpush2.bf16.msra.mxu0 0
    %147 = vmatprep.subr.bf16.mxu0 0
    %148 = vmatpush2.bf16.msra.mxu0 0
    %149 = vmatprep.subr.bf16.mxu0 0
    %150 = vmatpush2.bf16.msra.mxu0 0
    %151 = vmatprep.subr.bf16.mxu0 0
    %152 = vmatpush2.bf16.msra.mxu0 0
    %153 = vmatprep.mubr.bf16.mxu0 0
    %154 = vmatmul.mubr.bf16.gmra.mxu0 %v83
    %v155 = vpop.f32.mrf.mxu0
    %v156 = vadd.f32 %v73, %v155
    %v157 = vpop.f32.mrf.mxu0
    %v158 = vpop.f32.mrf.mxu0
    %v159 = vadd.f32 %v73, %v158
    %v160 = vpop.f32.mrf.mxu0
    %161 = vmatprep.mubr.bf16.mxu0 0
    %162 = vmatmul.mubr.bf16.gmra.mxu0 %v86
    %v163 = vpop.f32.mrf.mxu0
    %v164 = vadd.f32 %v73, %v163
    %v165 = vpop.f32.mrf.mxu0
    %v166 = vpop.f32.mrf.mxu0
    %v167 = vadd.f32 %v73, %v166
    %v168 = vpop.f32.mrf.mxu0
    %169 = vmatprep.mubr.bf16.mxu0 0
    %170 = vmatmul.mubr.bf16.gmra.mxu0 %v89
    %v171 = vpop.f32.mrf.mxu0
    %v172 = vadd.f32 %v73, %v171
    %v173 = vpop.f32.mrf.mxu0
    %v174 = vpop.f32.mrf.mxu0
    %v175 = vadd.f32 %v73, %v174
    %v176 = vpop.f32.mrf.mxu0
    %177 = vmatprep.mubr.bf16.mxu0 0
    %178 = vmatmul.mubr.bf16.gmra.mxu0 %v92
    %v179 = vpop.f32.mrf.mxu0
    %v180 = vadd.f32 %v73, %v179
    %v181 = vpop.f32.mrf.mxu0
    %v182 = vpop.f32.mrf.mxu0
    %v183 = vadd.f32 %v73, %v182
    %v184 = vpop.f32.mrf.mxu0
    %185 = vmatprep.mubr.bf16.mxu0 0
    %186 = vmatmul.mubr.bf16.gmra.mxu0 %v95
    %v187 = vpop.f32.mrf.mxu0
    %v188 = vadd.f32 %v73, %v187
    %v189 = vpop.f32.mrf.mxu0
    %v190 = vpop.f32.mrf.mxu0
    %v191 = vadd.f32 %v73, %v190
    %v192 = vpop.f32.mrf.mxu0
    %193 = vmatprep.mubr.bf16.mxu0 0
    %194 = vmatmul.mubr.bf16.gmra.mxu0 %v98
    %v195 = vpop.f32.mrf.mxu0
    %v196 = vadd.f32 %v73, %v195
    %v197 = vpop.f32.mrf.mxu0
    %v198 = vpop.f32.mrf.mxu0
    %v199 = vadd.f32 %v73, %v198
    %v200 = vpop.f32.mrf.mxu0
    %201 = vmatprep.mubr.bf16.mxu0 0
    %202 = vmatmul.mubr.bf16.gmra.mxu0 %v101
    %v203 = vpop.f32.mrf.mxu0
    %v204 = vadd.f32 %v73, %v203
    %v205 = vpop.f32.mrf.mxu0
    %v206 = vpop.f32.mrf.mxu0
    %v207 = vadd.f32 %v73, %v206
    %v208 = vpop.f32.mrf.mxu0
    %209 = vmatprep.mubr.bf16.mxu0 0
    %210 = vmatmul.mubr.bf16.gmra.mxu0 %v104
    %v211 = vpop.f32.mrf.mxu0
    %v212 = vadd.f32 %v73, %v211
    %v213 = vpop.f32.mrf.mxu0
    %v214 = vpop.f32.mrf.mxu0
    %v215 = vadd.f32 %v73, %v214
    %v216 = vpop.f32.mrf.mxu0
    %217 = vmatprep.mubr.bf16.mxu0 0
    %218 = vmatmul.mubr.bf16.gmra.mxu0 %v107
    %v219 = vpop.f32.mrf.mxu0
    %v220 = vadd.f32 %v73, %v219
    %v221 = vpop.f32.mrf.mxu0
    %v222 = vpop.f32.mrf.mxu0
    %v223 = vadd.f32 %v73, %v222
    %v224 = vpop.f32.mrf.mxu0
    %225 = vmatprep.mubr.bf16.mxu0 0
    %226 = vmatmul.mubr.bf16.gmra.mxu0 %v110
    %v227 = vpop.f32.mrf.mxu0
    %v228 = vadd.f32 %v73, %v227
    %v229 = vpop.f32.mrf.mxu0
    %v230 = vpop.f32.mrf.mxu0
    %v231 = vadd.f32 %v73, %v230
    %v232 = vpop.f32.mrf.mxu0
    %233 = vmatprep.mubr.bf16.mxu0 0
    %234 = vmatmul.mubr.bf16.gmra.mxu0 %v113
    %v235 = vpop.f32.mrf.mxu0
    %v236 = vadd.f32 %v73, %v235
    %v237 = vpop.f32.mrf.mxu0
    %v238 = vpop.f32.mrf.mxu0
    %v239 = vadd.f32 %v73, %v238
    %v240 = vpop.f32.mrf.mxu0
    %241 = vmatprep.mubr.bf16.mxu0 0
    %242 = vmatmul.mubr.bf16.gmra.mxu0 %v116
    %v243 = vpop.f32.mrf.mxu0
    %v244 = vadd.f32 %v73, %v243
    %v245 = vpop.f32.mrf.mxu0
    %v246 = vpop.f32.mrf.mxu0
    %v247 = vadd.f32 %v73, %v246
    %v248 = vpop.f32.mrf.mxu0
    %249 = vmatprep.mubr.bf16.mxu0 0
    %250 = vmatmul.mubr.bf16.gmra.mxu0 %v119
    %v251 = vpop.f32.mrf.mxu0
    %v252 = vadd.f32 %v73, %v251
    %v253 = vpop.f32.mrf.mxu0
    %v254 = vpop.f32.mrf.mxu0
    %v255 = vadd.f32 %v73, %v254
    %v256 = vpop.f32.mrf.mxu0
    %257 = vdwg.mxu0
    %v258 = vmax.f32 %v156, 0.0
    %v259 = vmax.f32 %v159, 0.0
    %v260 = vmax.f32 %v164, 0.0
    %v261 = vmax.f32 %v167, 0.0
    %v262 = vmax.f32 %v172, 0.0
    %v263 = vmax.f32 %v175, 0.0
    %v264 = vmax.f32 %v180, 0.0
    %v265 = vmax.f32 %v183, 0.0
    %v266 = vmax.f32 %v188, 0.0
    %v267 = vmax.f32 %v191, 0.0
    %v268 = vmax.f32 %v196, 0.0
    %v269 = vmax.f32 %v199, 0.0
    %v270 = vmax.f32 %v204, 0.0
    %v271 = vmax.f32 %v207, 0.0
    %v272 = vmax.f32 %v212, 0.0
    %v273 = vmax.f32 %v215, 0.0
    %v274 = vmax.f32 %v220, 0.0
    %v275 = vmax.f32 %v223, 0.0
    %v276 = vmax.f32 %v228, 0.0
    %v277 = vmax.f32 %v231, 0.0
    %v278 = vmax.f32 %v236, 0.0
    %v279 = vmax.f32 %v239, 0.0
    %v280 = vmax.f32 %v244, 0.0
    %v281 = vmax.f32 %v247, 0.0
    %v282 = vmax.f32 %v252, 0.0
    %v283 = vmax.f32 %v255, 0.0
    %v284 = vpack.c.bf16 %v259, %v258
    %v285 = vpack.c.bf16 %v261, %v260
    %v286 = vpack.c.bf16 %v263, %v262
    %v287 = vpack.c.bf16 %v265, %v264
    %v288 = vpack.c.bf16 %v267, %v266
    %v289 = vpack.c.bf16 %v269, %v268
    %v290 = vpack.c.bf16 %v271, %v270
    %v291 = vpack.c.bf16 %v273, %v272
    %v292 = vpack.c.bf16 %v275, %v274
    %v293 = vpack.c.bf16 %v277, %v276
    %v294 = vpack.c.bf16 %v279, %v278
    %v295 = vpack.c.bf16 %v281, %v280
    %v296 = vpack.c.bf16 %v283, %v282
    %v297 = vld [vmem:[%s3] sm:$0xf]
    %v298 = vld [vmem:[%s3 + $0x4] sm:$0xf]
    %v299 = vld [vmem:[%s3 + $0x8] sm:$0xf]
    %v300 = vld [vmem:[%s3 + $0xc] sm:$0xf]
    %v301 = vld [vmem:[%s3 + $0x10] sm:$0xf]
    %v302 = vld [vmem:[%s3 + $0x14] sm:$0xf]
    %v303 = vld [vmem:[%s3 + $0x18] sm:$0xf]
    %v304 = vld [vmem:[%s3 + $0x1c] sm:$0xf]
    %v305 = vld [vmem:[%s3 + $0x20] sm:$0xf]
    %v306 = vld [vmem:[%s3 + $0x24] sm:$0xf]
    %v307 = vld [vmem:[%s3 + $0x28] sm:$0xf]
    %v308 = vld [vmem:[%s3 + $0x2c] sm:$0xf]
    %v309 = vld [vmem:[%s3 + $0x30] sm:$0xf]
    %v310 = vld [vmem:[%s3 + $0x34] sm:$0xf]
    %v311 = vld [vmem:[%s3 + $0x38] sm:$0xf]
    %v312 = vld [vmem:[%s3 + $0x3c] sm:$0xf]
    %v313 = vld [vmem:[%s4] sm:$0x1]
    %v315 = vlaneseq
    %v316 = vshrl.u32 %v315, 7
    %v317 = vsub.s32 0, %v316
    %v318 = vrot.slane %v313, %v317
    %v336 = vunpack.c.l.b16 %v297
    %v337 = vunpack.c.l.b16 %v298
    %v338 = vunpack.c.l.b16 %v299
    %v339 = vunpack.c.l.b16 %v300
    %v340 = vunpack.c.l.b16 %v301
    %v341 = vunpack.c.l.b16 %v302
    %v342 = vunpack.c.l.b16 %v303
    %v343 = vunpack.c.l.b16 %v304
    %v344 = vunpack.c.l.b16 %v305
    %v345 = vunpack.c.l.b16 %v306
    %v346 = vunpack.c.l.b16 %v307
    %v347 = vunpack.c.l.b16 %v308
    %v348 = vunpack.c.l.b16 %v309
    %v349 = vunpack.c.l.b16 %v310
    %v350 = vunpack.c.l.b16 %v311
    %v351 = vunpack.c.l.b16 %v312
    %v352 = vpack.c.b16 %v337, %v336
    %v353 = vpack.c.b16 %v339, %v338
    %v354 = vpack.c.b16 %v341, %v340
    %v355 = vpack.c.b16 %v343, %v342
    %v356 = vpack.c.b16 %v345, %v344
    %v357 = vpack.c.b16 %v347, %v346
    %v358 = vpack.c.b16 %v349, %v348
    %v359 = vpack.c.b16 %v351, %v350
    %368 = vmatprep.subr.bf16.mxu0 0
    %369 = vmatpush1.bf16.msra.mxu0 %v359
    %370 = vmatprep.subr.bf16.mxu0 0
    %371 = vmatpush1.bf16.msra.mxu0 %v358
    %372 = vmatprep.subr.bf16.mxu0 0
    %373 = vmatpush1.bf16.msra.mxu0 %v357
    %374 = vmatprep.subr.bf16.mxu0 0
    %375 = vmatpush1.bf16.msra.mxu0 %v356
    %376 = vmatprep.subr.bf16.mxu0 0
    %377 = vmatpush1.bf16.msra.mxu0 %v355
    %378 = vmatprep.subr.bf16.mxu0 0
    %379 = vmatpush1.bf16.msra.mxu0 %v354
    %380 = vmatprep.subr.bf16.mxu0 0
    %381 = vmatpush1.bf16.msra.mxu0 %v353
    %382 = vmatprep.subr.bf16.mxu0 0
    %383 = vmatpush1.bf16.msra.mxu0 %v352
    %384 = vmatprep.subr.bf16.mxu0 0
    %385 = vmatpush2.bf16.msra.mxu0 0
    %386 = vmatprep.subr.bf16.mxu0 0
    %387 = vmatpush2.bf16.msra.mxu0 0
    %388 = vmatprep.subr.bf16.mxu0 0
    %389 = vmatpush2.bf16.msra.mxu0 0
    %390 = vmatprep.subr.bf16.mxu0 0
    %391 = vmatpush2.bf16.msra.mxu0 0
    %392 = vmatprep.subr.bf16.mxu0 0
    %393 = vmatpush2.bf16.msra.mxu0 0
    %394 = vmatprep.subr.bf16.mxu0 0
    %395 = vmatpush2.bf16.msra.mxu0 0
    %396 = vmatprep.subr.bf16.mxu0 0
    %397 = vmatpush2.bf16.msra.mxu0 0
    %398 = vmatprep.subr.bf16.mxu0 0
    %399 = vmatpush2.bf16.msra.mxu0 0
    %400 = vmatprep.mubr.bf16.mxu0 0
    %401 = vmatmul.mubr.bf16.gmra.mxu0 %v284
    %v402 = vpop.f32.mrf.mxu0
    %v403 = vadd.f32 %v318, %v402
    %v404 = vpop.f32.mrf.mxu0
    %v405 = vpop.f32.mrf.mxu0
    %v406 = vadd.f32 %v318, %v405
    %v407 = vpop.f32.mrf.mxu0
    %408 = vmatprep.mubr.bf16.mxu0 0
    %409 = vmatmul.mubr.bf16.gmra.mxu0 %v285
    %v410 = vpop.f32.mrf.mxu0
    %v411 = vadd.f32 %v318, %v410
    %v412 = vpop.f32.mrf.mxu0
    %v413 = vpop.f32.mrf.mxu0
    %v414 = vadd.f32 %v318, %v413
    %v415 = vpop.f32.mrf.mxu0
    %416 = vmatprep.mubr.bf16.mxu0 0
    %417 = vmatmul.mubr.bf16.gmra.mxu0 %v286
    %v418 = vpop.f32.mrf.mxu0
    %v419 = vadd.f32 %v318, %v418
    %v420 = vpop.f32.mrf.mxu0
    %v421 = vpop.f32.mrf.mxu0
    %v422 = vadd.f32 %v318, %v421
    %v423 = vpop.f32.mrf.mxu0
    %424 = vmatprep.mubr.bf16.mxu0 0
    %425 = vmatmul.mubr.bf16.gmra.mxu0 %v287
    %v426 = vpop.f32.mrf.mxu0
    %v427 = vadd.f32 %v318, %v426
    %v428 = vpop.f32.mrf.mxu0
    %v429 = vpop.f32.mrf.mxu0
    %v430 = vadd.f32 %v318, %v429
    %v431 = vpop.f32.mrf.mxu0
    %432 = vmatprep.mubr.bf16.mxu0 0
    %433 = vmatmul.mubr.bf16.gmra.mxu0 %v288
    %v434 = vpop.f32.mrf.mxu0
    %v435 = vadd.f32 %v318, %v434
    %v436 = vpop.f32.mrf.mxu0
    %v437 = vpop.f32.mrf.mxu0
    %v438 = vadd.f32 %v318, %v437
    %v439 = vpop.f32.mrf.mxu0
    %440 = vmatprep.mubr.bf16.mxu0 0
    %441 = vmatmul.mubr.bf16.gmra.mxu0 %v289
    %v442 = vpop.f32.mrf.mxu0
    %v443 = vadd.f32 %v318, %v442
    %v444 = vpop.f32.mrf.mxu0
    %v445 = vpop.f32.mrf.mxu0
    %v446 = vadd.f32 %v318, %v445
    %v447 = vpop.f32.mrf.mxu0
    %448 = vmatprep.mubr.bf16.mxu0 0
    %449 = vmatmul.mubr.bf16.gmra.mxu0 %v290
    %v450 = vpop.f32.mrf.mxu0
    %v451 = vadd.f32 %v318, %v450
    %v452 = vpop.f32.mrf.mxu0
    %v453 = vpop.f32.mrf.mxu0
    %v454 = vadd.f32 %v318, %v453
    %v455 = vpop.f32.mrf.mxu0
    %456 = vmatprep.mubr.bf16.mxu0 0
    %457 = vmatmul.mubr.bf16.gmra.mxu0 %v291
    %v458 = vpop.f32.mrf.mxu0
    %v459 = vadd.f32 %v318, %v458
    %v460 = vpop.f32.mrf.mxu0
    %v461 = vpop.f32.mrf.mxu0
    %v462 = vadd.f32 %v318, %v461
    %v463 = vpop.f32.mrf.mxu0
    %464 = vmatprep.mubr.bf16.mxu0 0
    %465 = vmatmul.mubr.bf16.gmra.mxu0 %v292
    %v466 = vpop.f32.mrf.mxu0
    %v467 = vadd.f32 %v318, %v466
    %v468 = vpop.f32.mrf.mxu0
    %v469 = vpop.f32.mrf.mxu0
    %v470 = vadd.f32 %v318, %v469
    %v471 = vpop.f32.mrf.mxu0
    %472 = vmatprep.mubr.bf16.mxu0 0
    %473 = vmatmul.mubr.bf16.gmra.mxu0 %v293
    %v474 = vpop.f32.mrf.mxu0
    %v475 = vadd.f32 %v318, %v474
    %v476 = vpop.f32.mrf.mxu0
    %v477 = vpop.f32.mrf.mxu0
    %v478 = vadd.f32 %v318, %v477
    %v479 = vpop.f32.mrf.mxu0
    %480 = vmatprep.mubr.bf16.mxu0 0
    %481 = vmatmul.mubr.bf16.gmra.mxu0 %v294
    %v482 = vpop.f32.mrf.mxu0
    %v483 = vadd.f32 %v318, %v482
    %v484 = vpop.f32.mrf.mxu0
    %v485 = vpop.f32.mrf.mxu0
    %v486 = vadd.f32 %v318, %v485
    %v487 = vpop.f32.mrf.mxu0
    %488 = vmatprep.mubr.bf16.mxu0 0
    %489 = vmatmul.mubr.bf16.gmra.mxu0 %v295
    %v490 = vpop.f32.mrf.mxu0
    %v491 = vadd.f32 %v318, %v490
    %v492 = vpop.f32.mrf.mxu0
    %v493 = vpop.f32.mrf.mxu0
    %v494 = vadd.f32 %v318, %v493
    %v495 = vpop.f32.mrf.mxu0
    %496 = vmatprep.mubr.bf16.mxu0 0
    %497 = vmatmul.mubr.bf16.gmra.mxu0 %v296
    %v498 = vpop.f32.mrf.mxu0
    %v499 = vadd.f32 %v318, %v498
    %v500 = vpop.f32.mrf.mxu0
    %v501 = vpop.f32.mrf.mxu0
    %v502 = vadd.f32 %v318, %v501
    %v503 = vpop.f32.mrf.mxu0
    %504 = vdwg.mxu0
    %v505 = vmax.f32 %v403, 0.0
    %v506 = vmax.f32 %v406, 0.0
    %v507 = vmax.f32 %v411, 0.0
    %v508 = vmax.f32 %v414, 0.0
    %v509 = vmax.f32 %v419, 0.0
    %v510 = vmax.f32 %v422, 0.0
    %v511 = vmax.f32 %v427, 0.0
    %v512 = vmax.f32 %v430, 0.0
    %v513 = vmax.f32 %v435, 0.0
    %v514 = vmax.f32 %v438, 0.0
    %v515 = vmax.f32 %v443, 0.0
    %v516 = vmax.f32 %v446, 0.0
    %v517 = vmax.f32 %v451, 0.0
    %v518 = vmax.f32 %v454, 0.0
    %v519 = vmax.f32 %v459, 0.0
    %v520 = vmax.f32 %v462, 0.0
    %v521 = vmax.f32 %v467, 0.0
    %v522 = vmax.f32 %v470, 0.0
    %v523 = vmax.f32 %v475, 0.0
    %v524 = vmax.f32 %v478, 0.0
    %v525 = vmax.f32 %v483, 0.0
    %v526 = vmax.f32 %v486, 0.0
    %v527 = vmax.f32 %v491, 0.0
    %v528 = vmax.f32 %v494, 0.0
    %v529 = vmax.f32 %v499, 0.0
    %v530 = vmax.f32 %v502, 0.0
    %v531 = vpack.c.bf16 %v506, %v505
    %v532 = vpack.c.bf16 %v508, %v507
    %v533 = vpack.c.bf16 %v510, %v509
    %v534 = vpack.c.bf16 %v512, %v511
    %v535 = vpack.c.bf16 %v514, %v513
    %v536 = vpack.c.bf16 %v516, %v515
    %v537 = vpack.c.bf16 %v518, %v517
    %v538 = vpack.c.bf16 %v520, %v519
    %v539 = vpack.c.bf16 %v522, %v521
    %v540 = vpack.c.bf16 %v524, %v523
    %v541 = vpack.c.bf16 %v526, %v525
    %v542 = vpack.c.bf16 %v528, %v527
    %v543 = vpack.c.bf16 %v530, %v529
    %v544 = vld [vmem:[%s5] sm:$0xf]
    %v545 = vld [vmem:[%s5 + $0x4] sm:$0xf]
    %v546 = vld [vmem:[%s5 + $0x8] sm:$0xf]
    %v547 = vld [vmem:[%s5 + $0xc] sm:$0xf]
    %v548 = vld [vmem:[%s5 + $0x10] sm:$0xf]
    %v549 = vld [vmem:[%s5 + $0x14] sm:$0xf]
    %v550 = vld [vmem:[%s5 + $0x18] sm:$0xf]
    %v551 = vld [vmem:[%s5 + $0x1c] sm:$0xf]
    %v552 = vld [vmem:[%s5 + $0x20] sm:$0xf]
    %v553 = vld [vmem:[%s5 + $0x24] sm:$0xf]
    %v554 = vld [vmem:[%s5 + $0x28] sm:$0xf]
    %v555 = vld [vmem:[%s5 + $0x2c] sm:$0xf]
    %v556 = vld [vmem:[%s5 + $0x30] sm:$0xf]
    %v557 = vld [vmem:[%s5 + $0x34] sm:$0xf]
    %v558 = vld [vmem:[%s5 + $0x38] sm:$0xf]
    %v559 = vld [vmem:[%s5 + $0x3c] sm:$0xf]
    %v560 = vld [vmem:[%s6] sm:$0x1]
    %v562 = vlaneseq
    %v563 = vshrl.u32 %v562, 7
    %v564 = vsub.s32 0, %v563
    %v565 = vrot.slane %v560, %v564
    %v583 = vunpack.c.l.b16 %v544
    %v584 = vunpack.c.l.b16 %v545
    %v585 = vunpack.c.l.b16 %v546
    %v586 = vunpack.c.l.b16 %v547
    %v587 = vunpack.c.l.b16 %v548
    %v588 = vunpack.c.l.b16 %v549
    %v589 = vunpack.c.l.b16 %v550
    %v590 = vunpack.c.l.b16 %v551
    %v591 = vunpack.c.l.b16 %v552
    %v592 = vunpack.c.l.b16 %v553
    %v593 = vunpack.c.l.b16 %v554
    %v594 = vunpack.c.l.b16 %v555
    %v595 = vunpack.c.l.b16 %v556
    %v596 = vunpack.c.l.b16 %v557
    %v597 = vunpack.c.l.b16 %v558
    %v598 = vunpack.c.l.b16 %v559
    %v599 = vpack.c.b16 %v584, %v583
    %v600 = vpack.c.b16 %v586, %v585
    %v601 = vpack.c.b16 %v588, %v587
    %v602 = vpack.c.b16 %v590, %v589
    %v603 = vpack.c.b16 %v592, %v591
    %v604 = vpack.c.b16 %v594, %v593
    %v605 = vpack.c.b16 %v596, %v595
    %v606 = vpack.c.b16 %v598, %v597
    %615 = vmatprep.subr.bf16.mxu0 0
    %616 = vmatpush1.bf16.msra.mxu0 %v606
    %617 = vmatprep.subr.bf16.mxu0 0
    %618 = vmatpush1.bf16.msra.mxu0 %v605
    %619 = vmatprep.subr.bf16.mxu0 0
    %620 = vmatpush1.bf16.msra.mxu0 %v604
    %621 = vmatprep.subr.bf16.mxu0 0
    %622 = vmatpush1.bf16.msra.mxu0 %v603
    %623 = vmatprep.subr.bf16.mxu0 0
    %624 = vmatpush1.bf16.msra.mxu0 %v602
    %625 = vmatprep.subr.bf16.mxu0 0
    %626 = vmatpush1.bf16.msra.mxu0 %v601
    %627 = vmatprep.subr.bf16.mxu0 0
    %628 = vmatpush1.bf16.msra.mxu0 %v600
    %629 = vmatprep.subr.bf16.mxu0 0
    %630 = vmatpush1.bf16.msra.mxu0 %v599
    %631 = vmatprep.subr.bf16.mxu0 0
    %632 = vmatpush2.bf16.msra.mxu0 0
    %633 = vmatprep.subr.bf16.mxu0 0
    %634 = vmatpush2.bf16.msra.mxu0 0
    %635 = vmatprep.subr.bf16.mxu0 0
    %636 = vmatpush2.bf16.msra.mxu0 0
    %637 = vmatprep.subr.bf16.mxu0 0
    %638 = vmatpush2.bf16.msra.mxu0 0
    %639 = vmatprep.subr.bf16.mxu0 0
    %640 = vmatpush2.bf16.msra.mxu0 0
    %641 = vmatprep.subr.bf16.mxu0 0
    %642 = vmatpush2.bf16.msra.mxu0 0
    %643 = vmatprep.subr.bf16.mxu0 0
    %644 = vmatpush2.bf16.msra.mxu0 0
    %645 = vmatprep.subr.bf16.mxu0 0
    %646 = vmatpush2.bf16.msra.mxu0 0
    %647 = vmatprep.mubr.bf16.mxu0 0
    %648 = vmatmul.mubr.bf16.gmra.mxu0 %v531
    %v649 = vpop.f32.mrf.mxu0
    %v650 = vadd.f32 %v565, %v649
    %v651 = vpop.f32.mrf.mxu0
    %v652 = vpop.f32.mrf.mxu0
    %v653 = vadd.f32 %v565, %v652
    %v654 = vpop.f32.mrf.mxu0
    %655 = vmatprep.mubr.bf16.mxu0 0
    %656 = vmatmul.mubr.bf16.gmra.mxu0 %v532
    %v657 = vpop.f32.mrf.mxu0
    %v658 = vadd.f32 %v565, %v657
    %v659 = vpop.f32.mrf.mxu0
    %v660 = vpop.f32.mrf.mxu0
    %v661 = vadd.f32 %v565, %v660
    %v662 = vpop.f32.mrf.mxu0
    %663 = vmatprep.mubr.bf16.mxu0 0
    %664 = vmatmul.mubr.bf16.gmra.mxu0 %v533
    %v665 = vpop.f32.mrf.mxu0
    %v666 = vadd.f32 %v565, %v665
    %v667 = vpop.f32.mrf.mxu0
    %v668 = vpop.f32.mrf.mxu0
    %v669 = vadd.f32 %v565, %v668
    %v670 = vpop.f32.mrf.mxu0
    %671 = vmatprep.mubr.bf16.mxu0 0
    %672 = vmatmul.mubr.bf16.gmra.mxu0 %v534
    %v673 = vpop.f32.mrf.mxu0
    %v674 = vadd.f32 %v565, %v673
    %v675 = vpop.f32.mrf.mxu0
    %v676 = vpop.f32.mrf.mxu0
    %v677 = vadd.f32 %v565, %v676
    %v678 = vpop.f32.mrf.mxu0
    %679 = vmatprep.mubr.bf16.mxu0 0
    %680 = vmatmul.mubr.bf16.gmra.mxu0 %v535
    %v681 = vpop.f32.mrf.mxu0
    %v682 = vadd.f32 %v565, %v681
    %v683 = vpop.f32.mrf.mxu0
    %v684 = vpop.f32.mrf.mxu0
    %v685 = vadd.f32 %v565, %v684
    %v686 = vpop.f32.mrf.mxu0
    %687 = vmatprep.mubr.bf16.mxu0 0
    %688 = vmatmul.mubr.bf16.gmra.mxu0 %v536
    %v689 = vpop.f32.mrf.mxu0
    %v690 = vadd.f32 %v565, %v689
    %v691 = vpop.f32.mrf.mxu0
    %v692 = vpop.f32.mrf.mxu0
    %v693 = vadd.f32 %v565, %v692
    %v694 = vpop.f32.mrf.mxu0
    %695 = vmatprep.mubr.bf16.mxu0 0
    %696 = vmatmul.mubr.bf16.gmra.mxu0 %v537
    %v697 = vpop.f32.mrf.mxu0
    %v698 = vadd.f32 %v565, %v697
    %v699 = vpop.f32.mrf.mxu0
    %v700 = vpop.f32.mrf.mxu0
    %v701 = vadd.f32 %v565, %v700
    %v702 = vpop.f32.mrf.mxu0
    %703 = vmatprep.mubr.bf16.mxu0 0
    %704 = vmatmul.mubr.bf16.gmra.mxu0 %v538
    %v705 = vpop.f32.mrf.mxu0
    %v706 = vadd.f32 %v565, %v705
    %v707 = vpop.f32.mrf.mxu0
    %v708 = vpop.f32.mrf.mxu0
    %v709 = vadd.f32 %v565, %v708
    %v710 = vpop.f32.mrf.mxu0
    %711 = vmatprep.mubr.bf16.mxu0 0
    %712 = vmatmul.mubr.bf16.gmra.mxu0 %v539
    %v713 = vpop.f32.mrf.mxu0
    %v714 = vadd.f32 %v565, %v713
    %v715 = vpop.f32.mrf.mxu0
    %v716 = vpop.f32.mrf.mxu0
    %v717 = vadd.f32 %v565, %v716
    %v718 = vpop.f32.mrf.mxu0
    %719 = vmatprep.mubr.bf16.mxu0 0
    %720 = vmatmul.mubr.bf16.gmra.mxu0 %v540
    %v721 = vpop.f32.mrf.mxu0
    %v722 = vadd.f32 %v565, %v721
    %v723 = vpop.f32.mrf.mxu0
    %v724 = vpop.f32.mrf.mxu0
    %v725 = vadd.f32 %v565, %v724
    %v726 = vpop.f32.mrf.mxu0
    %727 = vmatprep.mubr.bf16.mxu0 0
    %728 = vmatmul.mubr.bf16.gmra.mxu0 %v541
    %v729 = vpop.f32.mrf.mxu0
    %v730 = vadd.f32 %v565, %v729
    %v731 = vpop.f32.mrf.mxu0
    %v732 = vpop.f32.mrf.mxu0
    %v733 = vadd.f32 %v565, %v732
    %v734 = vpop.f32.mrf.mxu0
    %735 = vmatprep.mubr.bf16.mxu0 0
    %736 = vmatmul.mubr.bf16.gmra.mxu0 %v542
    %v737 = vpop.f32.mrf.mxu0
    %v738 = vadd.f32 %v565, %v737
    %v739 = vpop.f32.mrf.mxu0
    %v740 = vpop.f32.mrf.mxu0
    %v741 = vadd.f32 %v565, %v740
    %v742 = vpop.f32.mrf.mxu0
    %743 = vmatprep.mubr.bf16.mxu0 0
    %744 = vmatmul.mubr.bf16.gmra.mxu0 %v543
    %v745 = vpop.f32.mrf.mxu0
    %v746 = vadd.f32 %v565, %v745
    %v747 = vpop.f32.mrf.mxu0
    %v748 = vpop.f32.mrf.mxu0
    %v749 = vadd.f32 %v565, %v748
    %v750 = vpop.f32.mrf.mxu0
    %751 = vdwg.mxu0
    %v752 = vmax.f32 %v650, 0.0
    %v753 = vmax.f32 %v653, 0.0
    %v754 = vmax.f32 %v658, 0.0
    %v755 = vmax.f32 %v661, 0.0
    %v756 = vmax.f32 %v666, 0.0
    %v757 = vmax.f32 %v669, 0.0
    %v758 = vmax.f32 %v674, 0.0
    %v759 = vmax.f32 %v677, 0.0
    %v760 = vmax.f32 %v682, 0.0
    %v761 = vmax.f32 %v685, 0.0
    %v762 = vmax.f32 %v690, 0.0
    %v763 = vmax.f32 %v693, 0.0
    %v764 = vmax.f32 %v698, 0.0
    %v765 = vmax.f32 %v701, 0.0
    %v766 = vmax.f32 %v706, 0.0
    %v767 = vmax.f32 %v709, 0.0
    %v768 = vmax.f32 %v714, 0.0
    %v769 = vmax.f32 %v717, 0.0
    %v770 = vmax.f32 %v722, 0.0
    %v771 = vmax.f32 %v725, 0.0
    %v772 = vmax.f32 %v730, 0.0
    %v773 = vmax.f32 %v733, 0.0
    %v774 = vmax.f32 %v738, 0.0
    %v775 = vmax.f32 %v741, 0.0
    %v776 = vmax.f32 %v746, 0.0
    %v777 = vmax.f32 %v749, 0.0
    %vm778 = vcmask 261120
    %779 = vst.msk [vmem:[#allocation2] sm:$0xff] %vm778, %v752
    %780 = vst.msk [vmem:[#allocation2 + $0x8] sm:$0xff] %vm778, %v753
    %781 = vst.msk [vmem:[#allocation2 + $0x10] sm:$0xff] %vm778, %v754
    %782 = vst.msk [vmem:[#allocation2 + $0x18] sm:$0xff] %vm778, %v755
    %783 = vst.msk [vmem:[#allocation2 + $0x20] sm:$0xff] %vm778, %v756
    %784 = vst.msk [vmem:[#allocation2 + $0x28] sm:$0xff] %vm778, %v757
    %785 = vst.msk [vmem:[#allocation2 + $0x30] sm:$0xff] %vm778, %v758
    %786 = vst.msk [vmem:[#allocation2 + $0x38] sm:$0xff] %vm778, %v759
    %787 = vst.msk [vmem:[#allocation2 + $0x40] sm:$0xff] %vm778, %v760
    %788 = vst.msk [vmem:[#allocation2 + $0x48] sm:$0xff] %vm778, %v761
    %789 = vst.msk [vmem:[#allocation2 + $0x50] sm:$0xff] %vm778, %v762
    %790 = vst.msk [vmem:[#allocation2 + $0x58] sm:$0xff] %vm778, %v763
    %791 = vst.msk [vmem:[#allocation2 + $0x60] sm:$0xff] %vm778, %v764
    %792 = vst.msk [vmem:[#allocation2 + $0x68] sm:$0xff] %vm778, %v765
    %793 = vst.msk [vmem:[#allocation2 + $0x70] sm:$0xff] %vm778, %v766
    %794 = vst.msk [vmem:[#allocation2 + $0x78] sm:$0xff] %vm778, %v767
    %795 = vst.msk [vmem:[#allocation2 + $0x80] sm:$0xff] %vm778, %v768
    %796 = vst.msk [vmem:[#allocation2 + $0x88] sm:$0xff] %vm778, %v769
    %797 = vst.msk [vmem:[#allocation2 + $0x90] sm:$0xff] %vm778, %v770
    %798 = vst.msk [vmem:[#allocation2 + $0x98] sm:$0xff] %vm778, %v771
    %799 = vst.msk [vmem:[#allocation2 + $0xa0] sm:$0xff] %vm778, %v772
    %800 = vst.msk [vmem:[#allocation2 + $0xa8] sm:$0xff] %vm778, %v773
    %801 = vst.msk [vmem:[#allocation2 + $0xb0] sm:$0xff] %vm778, %v774
    %802 = vst.msk [vmem:[#allocation2 + $0xb8] sm:$0xff] %vm778, %v775
    %803 = vst.msk [vmem:[#allocation2 + $0xc0] sm:$0xff] %vm778, %v776
    %804 = vst.msk [vmem:[#allocation2 + $0xc8] sm:$0xff] %vm778, %v777
    // Predicated region
    $region30: #{tpu_custom_call.1} parent=1 // pred_check
      _
    $region31: #{tpu_custom_call.1} parent=1 // pred_check_branch
      %806 = sbr.rel (0) target = $region33
    $region32: #{tpu_custom_call.1} parent=1 // pred_region
      // Predicated region
      $region34: #{tpu_custom_call.1} parent=32 // pred_check
        _
      $region35: #{tpu_custom_call.1} parent=32 // pred_check_branch
        %808 = sbr.rel (0) target = $region37
      $region36: #{tpu_custom_call.1} parent=32 // pred_region
        // Predicated region
        $region38: #{tpu_custom_call.1} parent=36 // pred_check
          _
        $region39: #{tpu_custom_call.1} parent=36 // pred_check_branch
          %810 = sbr.rel (0) target = $region41
        $region40: #{tpu_custom_call.1} parent=36 // pred_region
          // Predicated region
          $region53: #{tpu_custom_call.1} parent=40 // pred_check
            _
          $region54: #{tpu_custom_call.1} parent=40 // pred_check_branch
            %874 = sbr.rel (0) target = $region56
          $region55: #{tpu_custom_call.1} parent=40 // pred_region
            loop: start=0, step=1, limit=1
            $region57: #{tpu_custom_call.1} parent=55 // loop_pre_header
              _
            $region58: #{tpu_custom_call.1} parent=55 // loop_header
              %s876 = sphi 0, %s880
              %p877 = scmp.ge.s32.totalorder %s876, 1
              %s881 = sphi [#allocation2], [#allocation2]
              %s882 = sphi %s7, %s7
            $region59: #{tpu_custom_call.1} parent=55 // loop_header_branch
              %879 = sbr.rel (%p877) target = $region63
            $region60: #{tpu_custom_call.1} parent=55 // loop_body
              %v883 = vld [vmem:[%s881] sm:$0xff]
              %884 = vst [vmem:[%s882] sm:$0xff] %v883
              %v885 = vld [vmem:[%s881 + $0x8] sm:$0xff]
              %886 = vst [vmem:[%s882 + $0x8] sm:$0xff] %v885
              %v887 = vld [vmem:[%s881 + $0x10] sm:$0xff]
              %888 = vst [vmem:[%s882 + $0x10] sm:$0xff] %v887
              %v889 = vld [vmem:[%s881 + $0x18] sm:$0xff]
              %890 = vst [vmem:[%s882 + $0x18] sm:$0xff] %v889
              %v891 = vld [vmem:[%s881 + $0x20] sm:$0xff]
              %892 = vst [vmem:[%s882 + $0x20] sm:$0xff] %v891
              %v893 = vld [vmem:[%s881 + $0x28] sm:$0xff]
              %894 = vst [vmem:[%s882 + $0x28] sm:$0xff] %v893
              %v895 = vld [vmem:[%s881 + $0x30] sm:$0xff]
              %896 = vst [vmem:[%s882 + $0x30] sm:$0xff] %v895
              %v897 = vld [vmem:[%s881 + $0x38] sm:$0xff]
              %898 = vst [vmem:[%s882 + $0x38] sm:$0xff] %v897
              %v899 = vld [vmem:[%s881 + $0x40] sm:$0xff]
              %900 = vst [vmem:[%s882 + $0x40] sm:$0xff] %v899
              %v901 = vld [vmem:[%s881 + $0x48] sm:$0xff]
              %902 = vst [vmem:[%s882 + $0x48] sm:$0xff] %v901
              %v903 = vld [vmem:[%s881 + $0x50] sm:$0xff]
              %904 = vst [vmem:[%s882 + $0x50] sm:$0xff] %v903
              %v905 = vld [vmem:[%s881 + $0x58] sm:$0xff]
              %906 = vst [vmem:[%s882 + $0x58] sm:$0xff] %v905
              %v907 = vld [vmem:[%s881 + $0x60] sm:$0xff]
              %908 = vst [vmem:[%s882 + $0x60] sm:$0xff] %v907
              %v909 = vld [vmem:[%s881 + $0x68] sm:$0xff]
              %910 = vst [vmem:[%s882 + $0x68] sm:$0xff] %v909
              %v911 = vld [vmem:[%s881 + $0x70] sm:$0xff]
              %912 = vst [vmem:[%s882 + $0x70] sm:$0xff] %v911
              %v913 = vld [vmem:[%s881 + $0x78] sm:$0xff]
              %914 = vst [vmem:[%s882 + $0x78] sm:$0xff] %v913
              %v915 = vld [vmem:[%s881 + $0x80] sm:$0xff]
              %916 = vst [vmem:[%s882 + $0x80] sm:$0xff] %v915
              %v917 = vld [vmem:[%s881 + $0x88] sm:$0xff]
              %918 = vst [vmem:[%s882 + $0x88] sm:$0xff] %v917
              %v919 = vld [vmem:[%s881 + $0x90] sm:$0xff]
              %920 = vst [vmem:[%s882 + $0x90] sm:$0xff] %v919
              %v921 = vld [vmem:[%s881 + $0x98] sm:$0xff]
              %922 = vst [vmem:[%s882 + $0x98] sm:$0xff] %v921
              %v923 = vld [vmem:[%s881 + $0xa0] sm:$0xff]
              %924 = vst [vmem:[%s882 + $0xa0] sm:$0xff] %v923
              %v925 = vld [vmem:[%s881 + $0xa8] sm:$0xff]
              %926 = vst [vmem:[%s882 + $0xa8] sm:$0xff] %v925
              %v927 = vld [vmem:[%s881 + $0xb0] sm:$0xff]
              %928 = vst [vmem:[%s882 + $0xb0] sm:$0xff] %v927
              %v929 = vld [vmem:[%s881 + $0xb8] sm:$0xff]
              %930 = vst [vmem:[%s882 + $0xb8] sm:$0xff] %v929
              %v931 = vld [vmem:[%s881 + $0xc0] sm:$0xff]
              %932 = vst [vmem:[%s882 + $0xc0] sm:$0xff] %v931
            $region61: #{tpu_custom_call.1} parent=55 // loop_footer
              %s880 = sadd.s32 1, %s876
            $region62: #{tpu_custom_call.1} parent=55 // loop_footer_branch
              %875 = sbr.rel target = $region58
            $region63: #{tpu_custom_call.1} parent=55 // loop_exit
              _
          $region56: #{tpu_custom_call.1} parent=40 // pred_fallthru
            _
          // Predicated region
          $region64: #{tpu_custom_call.1} parent=40 // pred_check
            _
          $region65: #{tpu_custom_call.1} parent=40 // pred_check_branch
            %934 = sbr.rel target = $region67
          $region66: #{tpu_custom_call.1} parent=40 // pred_region
            _
          $region67: #{tpu_custom_call.1} parent=40 // pred_fallthru
            _
        $region41: #{tpu_custom_call.1} parent=36 // pred_fallthru
          _
        // Predicated region
        $region42: #{tpu_custom_call.1} parent=36 // pred_check
          _
        $region43: #{tpu_custom_call.1} parent=36 // pred_check_branch
          %812 = sbr.rel target = $region45
        $region44: #{tpu_custom_call.1} parent=36 // pred_region
          %s814 = ssub.s32 256, 1
          loop: start=0, step=1, limit=1
          $region46: #{tpu_custom_call.1} parent=44 // loop_pre_header
            _
          $region47: #{tpu_custom_call.1} parent=44 // loop_header
            %s816 = sphi 0, %s820
            %p817 = scmp.ge.s32.totalorder %s816, 1
            %s821 = sphi [#allocation2], [#allocation2]
            %s822 = sphi %s7, %s7
          $region48: #{tpu_custom_call.1} parent=44 // loop_header_branch
            %819 = sbr.rel (%p817) target = $region52
          $region49: #{tpu_custom_call.1} parent=44 // loop_body
            %v823 = vld [vmem:[%s821] sm:%s814]
            %824 = vst [vmem:[%s822] sm:%s814] %v823
            %v825 = vld [vmem:[%s821 + $0x8] sm:%s814]
            %826 = vst [vmem:[%s822 + $0x8] sm:%s814] %v825
            %v827 = vld [vmem:[%s821 + $0x10] sm:%s814]
            %828 = vst [vmem:[%s822 + $0x10] sm:%s814] %v827
            %v829 = vld [vmem:[%s821 + $0x18] sm:%s814]
            %830 = vst [vmem:[%s822 + $0x18] sm:%s814] %v829
            %v831 = vld [vmem:[%s821 + $0x20] sm:%s814]
            %832 = vst [vmem:[%s822 + $0x20] sm:%s814] %v831
            %v833 = vld [vmem:[%s821 + $0x28] sm:%s814]
            %834 = vst [vmem:[%s822 + $0x28] sm:%s814] %v833
            %v835 = vld [vmem:[%s821 + $0x30] sm:%s814]
            %836 = vst [vmem:[%s822 + $0x30] sm:%s814] %v835
            %v837 = vld [vmem:[%s821 + $0x38] sm:%s814]
            %838 = vst [vmem:[%s822 + $0x38] sm:%s814] %v837
            %v839 = vld [vmem:[%s821 + $0x40] sm:%s814]
            %840 = vst [vmem:[%s822 + $0x40] sm:%s814] %v839
            %v841 = vld [vmem:[%s821 + $0x48] sm:%s814]
            %842 = vst [vmem:[%s822 + $0x48] sm:%s814] %v841
            %v843 = vld [vmem:[%s821 + $0x50] sm:%s814]
            %844 = vst [vmem:[%s822 + $0x50] sm:%s814] %v843
            %v845 = vld [vmem:[%s821 + $0x58] sm:%s814]
            %846 = vst [vmem:[%s822 + $0x58] sm:%s814] %v845
            %v847 = vld [vmem:[%s821 + $0x60] sm:%s814]
            %848 = vst [vmem:[%s822 + $0x60] sm:%s814] %v847
            %v849 = vld [vmem:[%s821 + $0x68] sm:%s814]
            %850 = vst [vmem:[%s822 + $0x68] sm:%s814] %v849
            %v851 = vld [vmem:[%s821 + $0x70] sm:%s814]
            %852 = vst [vmem:[%s822 + $0x70] sm:%s814] %v851
            %v853 = vld [vmem:[%s821 + $0x78] sm:%s814]
            %854 = vst [vmem:[%s822 + $0x78] sm:%s814] %v853
            %v855 = vld [vmem:[%s821 + $0x80] sm:%s814]
            %856 = vst [vmem:[%s822 + $0x80] sm:%s814] %v855
            %v857 = vld [vmem:[%s821 + $0x88] sm:%s814]
            %858 = vst [vmem:[%s822 + $0x88] sm:%s814] %v857
            %v859 = vld [vmem:[%s821 + $0x90] sm:%s814]
            %860 = vst [vmem:[%s822 + $0x90] sm:%s814] %v859
            %v861 = vld [vmem:[%s821 + $0x98] sm:%s814]
            %862 = vst [vmem:[%s822 + $0x98] sm:%s814] %v861
            %v863 = vld [vmem:[%s821 + $0xa0] sm:%s814]
            %864 = vst [vmem:[%s822 + $0xa0] sm:%s814] %v863
            %v865 = vld [vmem:[%s821 + $0xa8] sm:%s814]
            %866 = vst [vmem:[%s822 + $0xa8] sm:%s814] %v865
            %v867 = vld [vmem:[%s821 + $0xb0] sm:%s814]
            %868 = vst [vmem:[%s822 + $0xb0] sm:%s814] %v867
            %v869 = vld [vmem:[%s821 + $0xb8] sm:%s814]
            %870 = vst [vmem:[%s822 + $0xb8] sm:%s814] %v869
            %v871 = vld [vmem:[%s821 + $0xc0] sm:%s814]
            %872 = vst [vmem:[%s822 + $0xc0] sm:%s814] %v871
          $region50: #{tpu_custom_call.1} parent=44 // loop_footer
            %s820 = sadd.s32 1, %s816
          $region51: #{tpu_custom_call.1} parent=44 // loop_footer_branch
            %815 = sbr.rel target = $region47
          $region52: #{tpu_custom_call.1} parent=44 // loop_exit
            _
        $region45: #{tpu_custom_call.1} parent=36 // pred_fallthru
          _
      $region37: #{tpu_custom_call.1} parent=32 // pred_fallthru
        _
      %935 = vnop
    $region33: #{tpu_custom_call.1} parent=1 // pred_fallthru
      _
    // Predicated region
    $region68: #{tpu_custom_call.1} parent=1 // pred_check
      _
    $region69: #{tpu_custom_call.1} parent=1 // pred_check_branch
      %937 = sbr.rel (0) target = $region71
    $region70: #{tpu_custom_call.1} parent=1 // pred_region
      _
    $region71: #{tpu_custom_call.1} parent=1 // pred_fallthru
      _

// kernel: tpu_custom_call.1
$region0: #{tpu_custom_call.1}
  #allocation0 [shape = 'u32[]', space=smem, size = 0x4, offset = 0x4, fixed_abs, tag = 'smem constant byte address 0x4 - core index']
  #allocation1 [shape = 'u32[144,128]{1,0:T(1,128)}', space=vmem, size = 0x12000, scoped, tag = 'internal scratch']
  %s0 = inlined_call_operand.vmem [shape: f32[200,16], index: 0, kind: input, shape index: {}]
  %s1 = inlined_call_operand.vmem [shape: bf16[16,128], index: 1, kind: input, shape index: {}]
  %s2 = inlined_call_operand.vmem [shape: f32[1,128], index: 2, kind: input, shape index: {}]
  %s3 = inlined_call_operand.vmem [shape: bf16[128,128], index: 3, kind: input, shape index: {}]
  %s4 = inlined_call_operand.vmem [shape: f32[1,128], index: 4, kind: input, shape index: {}]
  %s5 = inlined_call_operand.vmem [shape: bf16[128,32], index: 5, kind: input, shape index: {}]
  %s6 = inlined_call_operand.vmem [shape: f32[1,32], index: 6, kind: input, shape index: {}]
  %s7 = inlined_call_operand.vmem [shape: f32[200,32], index: 7, kind: output, shape index: {}]
  %s8 = sld [smem:[#allocation0]]
  $region72: #{tpu_custom_call.1} parent=0
    _
  %s10 = ssub.s32 1, %s8
  %s11 = scalar_select 0, %s10, %s8
  $region1: #{tpu_custom_call.1} parent=0
    #allocation2 [shape = 'u8[106496]{0}', space=vmem, size = 0x1a000, scoped, tag = 'output window, operand 0, single buffered']
    // Predicated region
    $region2: #{tpu_custom_call.1} parent=1 // pred_check
      _
    $region3: #{tpu_custom_call.1} parent=1 // pred_check_branch
      %13 = sbr.rel (0) target = $region5
    $region4: #{tpu_custom_call.1} parent=1 // pred_region
      _
    $region5: #{tpu_custom_call.1} parent=1 // pred_fallthru
      _
    // Predicated region
    $region6: #{tpu_custom_call.1} parent=1 // pred_check
      _
    $region7: #{tpu_custom_call.1} parent=1 // pred_check_branch
      %15 = sbr.rel (0) target = $region9
    $region8: #{tpu_custom_call.1} parent=1 // pred_region
      _
    $region9: #{tpu_custom_call.1} parent=1 // pred_fallthru
      _
    // Predicated region
    $region10: #{tpu_custom_call.1} parent=1 // pred_check
      _
    $region11: #{tpu_custom_call.1} parent=1 // pred_check_branch
      %17 = sbr.rel (0) target = $region13
    $region12: #{tpu_custom_call.1} parent=1 // pred_region
      _
    $region13: #{tpu_custom_call.1} parent=1 // pred_fallthru
      _
    // Predicated region
    $region14: #{tpu_custom_call.1} parent=1 // pred_check
      _
    $region15: #{tpu_custom_call.1} parent=1 // pred_check_branch
      %19 = sbr.rel (0) target = $region17
    $region16: #{tpu_custom_call.1} parent=1 // pred_region
      _
    $region17: #{tpu_custom_call.1} parent=1 // pred_fallthru
      _
    // Predicated region
    $region18: #{tpu_custom_call.1} parent=1 // pred_check
      _
    $region19: #{tpu_custom_call.1} parent=1 // pred_check_branch
      %21 = sbr.rel (0) target = $region21
    $region20: #{tpu_custom_call.1} parent=1 // pred_region
      _
    $region21: #{tpu_custom_call.1} parent=1 // pred_fallthru
      _
    // Predicated region
    $region22: #{tpu_custom_call.1} parent=1 // pred_check
      _
    $region23: #{tpu_custom_call.1} parent=1 // pred_check_branch
      %23 = sbr.rel (0) target = $region25
    $region24: #{tpu_custom_call.1} parent=1 // pred_region
      _
    $region25: #{tpu_custom_call.1} parent=1 // pred_fallthru
      _
    // Predicated region
    $region26: #{tpu_custom_call.1} parent=1 // pred_check
      _
    $region27: #{tpu_custom_call.1} parent=1 // pred_check_branch
      %25 = sbr.rel (0) target = $region29
    $region28: #{tpu_custom_call.1} parent=1 // pred_region
      _
    $region29: #{tpu_custom_call.1} parent=1 // pred_fallthru
      _
    %v27 = vld [vmem:[%s0] sm:$0xff]
    %v28 = vld [vmem:[%s0 + $0x8] sm:$0xff]
    %v29 = vld [vmem:[%s0 + $0x10] sm:$0xff]
    %v30 = vld [vmem:[%s0 + $0x18] sm:$0xff]
    %v31 = vld [vmem:[%s0 + $0x20] sm:$0xff]
    %v32 = vld [vmem:[%s0 + $0x28] sm:$0xff]
    %v33 = vld [vmem:[%s0 + $0x30] sm:$0xff]
    %v34 = vld [vmem:[%s0 + $0x38] sm:$0xff]
    %v35 = vld [vmem:[%s0 + $0x40] sm:$0xff]
    %v36 = vld [vmem:[%s0 + $0x48] sm:$0xff]
    %v37 = vld [vmem:[%s0 + $0x50] sm:$0xff]
    %v38 = vld [vmem:[%s0 + $0x58] sm:$0xff]
    %v39 = vld [vmem:[%s0 + $0x60] sm:$0xff]
    %v40 = vld [vmem:[%s0 + $0x68] sm:$0xff]
    %v41 = vld [vmem:[%s0 + $0x70] sm:$0xff]
    %v42 = vld [vmem:[%s0 + $0x78] sm:$0xff]
    %v43 = vld [vmem:[%s0 + $0x80] sm:$0xff]
    %v44 = vld [vmem:[%s0 + $0x88] sm:$0xff]
    %v45 = vld [vmem:[%s0 + $0x90] sm:$0xff]
    %v46 = vld [vmem:[%s0 + $0x98] sm:$0xff]
    %v47 = vld [vmem:[%s0 + $0xa0] sm:$0xff]
    %v48 = vld [vmem:[%s0 + $0xa8] sm:$0xff]
    %v49 = vld [vmem:[%s0 + $0xb0] sm:$0xff]
    %v50 = vld [vmem:[%s0 + $0xb8] sm:$0xff]
    %v51 = vld [vmem:[%s0 + $0xc0] sm:$0xff]
    %v52 = vld [vmem:[%s0 + $0xc8] sm:$0xff]
    %v53 = vpack.c.bf16 %v28, %v27
    %v54 = vpack.c.bf16 %v30, %v29
    %v55 = vpack.c.bf16 %v32, %v31
    %v56 = vpack.c.bf16 %v34, %v33
    %v57 = vpack.c.bf16 %v36, %v35
    %v58 = vpack.c.bf16 %v38, %v37
    %v59 = vpack.c.bf16 %v40, %v39
    %v60 = vpack.c.bf16 %v42, %v41
    %v61 = vpack.c.bf16 %v44, %v43
    %v62 = vpack.c.bf16 %v46, %v45
    %v63 = vpack.c.bf16 %v48, %v47
    %v64 = vpack.c.bf16 %v50, %v49
    %v65 = vpack.c.bf16 %v52, %v51
    %v66 = vld [vmem:[%s1] sm:$0xf]
    %v67 = vld [vmem:[%s1 + $0x4] sm:$0xf]
    %v68 = vld [vmem:[%s2] sm:$0x1]
    %v70 = vlaneseq
    %v71 = vshrl.u32 %v70, 7
    %v72 = vsub.s32 0, %v71
    %v73 = vrot.slane %v68, %v72
    %v77 = vunpack.c.l.b16 %v66
    %v78 = vunpack.c.l.b16 %v67
    %v79 = vpack.c.b16 %v78, %v77
    %vm81 = vcmask 130048
    %v83 = vsel %vm81, %v53, 0
    %v86 = vsel %vm81, %v54, 0
    %v89 = vsel %vm81, %v55, 0
    %v92 = vsel %vm81, %v56, 0
    %v95 = vsel %vm81, %v57, 0
    %v98 = vsel %vm81, %v58, 0
    %v101 = vsel %vm81, %v59, 0
    %v104 = vsel %vm81, %v60, 0
    %v107 = vsel %vm81, %v61, 0
    %v110 = vsel %vm81, %v62, 0
    %v113 = vsel %vm81, %v63, 0
    %v116 = vsel %vm81, %v64, 0
    %v119 = vsel %vm81, %v65, 0
    %121 = vmatprep.subr.bf16.mxu0 0
    %122 = vmatpush1.bf16.msra.mxu0 0
    %123 = vmatprep.subr.bf16.mxu0 0
    %124 = vmatpush1.bf16.msra.mxu0 0
    %125 = vmatprep.subr.bf16.mxu0 0
    %126 = vmatpush1.bf16.msra.mxu0 0
    %127 = vmatprep.subr.bf16.mxu0 0
    %128 = vmatpush1.bf16.msra.mxu0 0
    %129 = vmatprep.subr.bf16.mxu0 0
    %130 = vmatpush1.bf16.msra.mxu0 0
    %131 = vmatprep.subr.bf16.mxu0 0
    %132 = vmatpush1.bf16.msra.mxu0 0
    %133 = vmatprep.subr.bf16.mxu0 0
    %134 = vmatpush1.bf16.msra.mxu0 0
    %135 = vmatprep.subr.bf16.mxu0 0
    %136 = vmatpush1.bf16.msra.mxu0 %v79
    %137 = vmatprep.subr.bf16.mxu0 0
    %138 = vmatpush2.bf16.msra.mxu0 0
    %139 = vmatprep.subr.bf16.mxu0 0
    %140 = vmatpush2.bf16.msra.mxu0 0
    %141 = vmatprep.subr.bf16.mxu0 0
    %142 = vmatpush2.bf16.msra.mxu0 0
    %143 = vmatprep.subr.bf16.mxu0 0
    %144 = vmatpush2.bf16.msra.mxu0 0
    %145 = vmatprep.subr.bf16.mxu0 0
    %146 = vmatpush2.bf16.msra.mxu0 0
    %147 = vmatprep.subr.bf16.mxu0 0
    %148 = vmatpush2.bf16.msra.mxu0 0
    %149 = vmatprep.subr.bf16.mxu0 0
    %150 = vmatpush2.bf16.msra.mxu0 0
    %151 = vmatprep.subr.bf16.mxu0 0
    %152 = vmatpush2.bf16.msra.mxu0 0
    %153 = vmatprep.mubr.bf16.mxu0 0
    %154 = vmatmul.mubr.bf16.gmra.mxu0 %v83
    %v155 = vpop.f32.mrf.mxu0
    %v156 = vadd.f32 %v73, %v155
    %v157 = vpop.f32.mrf.mxu0
    %v158 = vpop.f32.mrf.mxu0
    %v159 = vadd.f32 %v73, %v158
    %v160 = vpop.f32.mrf.mxu0
    %161 = vmatprep.mubr.bf16.mxu0 0
    %162 = vmatmul.mubr.bf16.gmra.mxu0 %v86
    %v163 = vpop.f32.mrf.mxu0
    %v164 = vadd.f32 %v73, %v163
    %v165 = vpop.f32.mrf.mxu0
    %v166 = vpop.f32.mrf.mxu0
    %v167 = vadd.f32 %v73, %v166
    %v168 = vpop.f32.mrf.mxu0
    %169 = vmatprep.mubr.bf16.mxu0 0
    %170 = vmatmul.mubr.bf16.gmra.mxu0 %v89
    %v171 = vpop.f32.mrf.mxu0
    %v172 = vadd.f32 %v73, %v171
    %v173 = vpop.f32.mrf.mxu0
    %v174 = vpop.f32.mrf.mxu0
    %v175 = vadd.f32 %v73, %v174
    %v176 = vpop.f32.mrf.mxu0
    %177 = vmatprep.mubr.bf16.mxu0 0
    %178 = vmatmul.mubr.bf16.gmra.mxu0 %v92
    %v179 = vpop.f32.mrf.mxu0
    %v180 = vadd.f32 %v73, %v179
    %v181 = vpop.f32.mrf.mxu0
    %v182 = vpop.f32.mrf.mxu0
    %v183 = vadd.f32 %v73, %v182
    %v184 = vpop.f32.mrf.mxu0
    %185 = vmatprep.mubr.bf16.mxu0 0
    %186 = vmatmul.mubr.bf16.gmra.mxu0 %v95
    %v187 = vpop.f32.mrf.mxu0
    %v188 = vadd.f32 %v73, %v187
    %v189 = vpop.f32.mrf.mxu0
    %v190 = vpop.f32.mrf.mxu0
    %v191 = vadd.f32 %v73, %v190
    %v192 = vpop.f32.mrf.mxu0
    %193 = vmatprep.mubr.bf16.mxu0 0
    %194 = vmatmul.mubr.bf16.gmra.mxu0 %v98
    %v195 = vpop.f32.mrf.mxu0
    %v196 = vadd.f32 %v73, %v195
    %v197 = vpop.f32.mrf.mxu0
    %v198 = vpop.f32.mrf.mxu0
    %v199 = vadd.f32 %v73, %v198
    %v200 = vpop.f32.mrf.mxu0
    %201 = vmatprep.mubr.bf16.mxu0 0
    %202 = vmatmul.mubr.bf16.gmra.mxu0 %v101
    %v203 = vpop.f32.mrf.mxu0
    %v204 = vadd.f32 %v73, %v203
    %v205 = vpop.f32.mrf.mxu0
    %v206 = vpop.f32.mrf.mxu0
    %v207 = vadd.f32 %v73, %v206
    %v208 = vpop.f32.mrf.mxu0
    %209 = vmatprep.mubr.bf16.mxu0 0
    %210 = vmatmul.mubr.bf16.gmra.mxu0 %v104
    %v211 = vpop.f32.mrf.mxu0
    %v212 = vadd.f32 %v73, %v211
    %v213 = vpop.f32.mrf.mxu0
    %v214 = vpop.f32.mrf.mxu0
    %v215 = vadd.f32 %v73, %v214
    %v216 = vpop.f32.mrf.mxu0
    %217 = vmatprep.mubr.bf16.mxu0 0
    %218 = vmatmul.mubr.bf16.gmra.mxu0 %v107
    %v219 = vpop.f32.mrf.mxu0
    %v220 = vadd.f32 %v73, %v219
    %v221 = vpop.f32.mrf.mxu0
    %v222 = vpop.f32.mrf.mxu0
    %v223 = vadd.f32 %v73, %v222
    %v224 = vpop.f32.mrf.mxu0
    %225 = vmatprep.mubr.bf16.mxu0 0
    %226 = vmatmul.mubr.bf16.gmra.mxu0 %v110
    %v227 = vpop.f32.mrf.mxu0
    %v228 = vadd.f32 %v73, %v227
    %v229 = vpop.f32.mrf.mxu0
    %v230 = vpop.f32.mrf.mxu0
    %v231 = vadd.f32 %v73, %v230
    %v232 = vpop.f32.mrf.mxu0
    %233 = vmatprep.mubr.bf16.mxu0 0
    %234 = vmatmul.mubr.bf16.gmra.mxu0 %v113
    %v235 = vpop.f32.mrf.mxu0
    %v236 = vadd.f32 %v73, %v235
    %v237 = vpop.f32.mrf.mxu0
    %v238 = vpop.f32.mrf.mxu0
    %v239 = vadd.f32 %v73, %v238
    %v240 = vpop.f32.mrf.mxu0
    %241 = vmatprep.mubr.bf16.mxu0 0
    %242 = vmatmul.mubr.bf16.gmra.mxu0 %v116
    %v243 = vpop.f32.mrf.mxu0
    %v244 = vadd.f32 %v73, %v243
    %v245 = vpop.f32.mrf.mxu0
    %v246 = vpop.f32.mrf.mxu0
    %v247 = vadd.f32 %v73, %v246
    %v248 = vpop.f32.mrf.mxu0
    %249 = vmatprep.mubr.bf16.mxu0 0
    %250 = vmatmul.mubr.bf16.gmra.mxu0 %v119
    %v251 = vpop.f32.mrf.mxu0
    %v252 = vadd.f32 %v73, %v251
    %v253 = vpop.f32.mrf.mxu0
    %v254 = vpop.f32.mrf.mxu0
    %v255 = vadd.f32 %v73, %v254
    %v256 = vpop.f32.mrf.mxu0
    %257 = vdwg.mxu0
    %v258 = vmax.f32 %v156, 0.0
    %v259 = vmax.f32 %v159, 0.0
    %v260 = vmax.f32 %v164, 0.0
    %v261 = vmax.f32 %v167, 0.0
    %v262 = vmax.f32 %v172, 0.0
    %v263 = vmax.f32 %v175, 0.0
    %v264 = vmax.f32 %v180, 0.0
    %v265 = vmax.f32 %v183, 0.0
    %v266 = vmax.f32 %v188, 0.0
    %v267 = vmax.f32 %v191, 0.0
    %v268 = vmax.f32 %v196, 0.0
    %v269 = vmax.f32 %v199, 0.0
    %v270 = vmax.f32 %v204, 0.0
    %v271 = vmax.f32 %v207, 0.0
    %v272 = vmax.f32 %v212, 0.0
    %v273 = vmax.f32 %v215, 0.0
    %v274 = vmax.f32 %v220, 0.0
    %v275 = vmax.f32 %v223, 0.0
    %v276 = vmax.f32 %v228, 0.0
    %v277 = vmax.f32 %v231, 0.0
    %v278 = vmax.f32 %v236, 0.0
    %v279 = vmax.f32 %v239, 0.0
    %v280 = vmax.f32 %v244, 0.0
    %v281 = vmax.f32 %v247, 0.0
    %v282 = vmax.f32 %v252, 0.0
    %v283 = vmax.f32 %v255, 0.0
    %v284 = vpack.c.bf16 %v259, %v258
    %v285 = vpack.c.bf16 %v261, %v260
    %v286 = vpack.c.bf16 %v263, %v262
    %v287 = vpack.c.bf16 %v265, %v264
    %v288 = vpack.c.bf16 %v267, %v266
    %v289 = vpack.c.bf16 %v269, %v268
    %v290 = vpack.c.bf16 %v271, %v270
    %v291 = vpack.c.bf16 %v273, %v272
    %v292 = vpack.c.bf16 %v275, %v274
    %v293 = vpack.c.bf16 %v277, %v276
    %v294 = vpack.c.bf16 %v279, %v278
    %v295 = vpack.c.bf16 %v281, %v280
    %v296 = vpack.c.bf16 %v283, %v282
    %v297 = vld [vmem:[%s3] sm:$0xf]
    %v298 = vld [vmem:[%s3 + $0x4] sm:$0xf]
    %v299 = vld [vmem:[%s3 + $0x8] sm:$0xf]
    %v300 = vld [vmem:[%s3 + $0xc] sm:$0xf]
    %v301 = vld [vmem:[%s3 + $0x10] sm:$0xf]
    %v302 = vld [vmem:[%s3 + $0x14] sm:$0xf]
    %v303 = vld [vmem:[%s3 + $0x18] sm:$0xf]
    %v304 = vld [vmem:[%s3 + $0x1c] sm:$0xf]
    %v305 = vld [vmem:[%s3 + $0x20] sm:$0xf]
    %v306 = vld [vmem:[%s3 + $0x24] sm:$0xf]
    %v307 = vld [vmem:[%s3 + $0x28] sm:$0xf]
    %v308 = vld [vmem:[%s3 + $0x2c] sm:$0xf]
    %v309 = vld [vmem:[%s3 + $0x30] sm:$0xf]
    %v310 = vld [vmem:[%s3 + $0x34] sm:$0xf]
    %v311 = vld [vmem:[%s3 + $0x38] sm:$0xf]
    %v312 = vld [vmem:[%s3 + $0x3c] sm:$0xf]
    %v313 = vld [vmem:[%s4] sm:$0x1]
    %v315 = vlaneseq
    %v316 = vshrl.u32 %v315, 7
    %v317 = vsub.s32 0, %v316
    %v318 = vrot.slane %v313, %v317
    %v336 = vunpack.c.l.b16 %v297
    %v337 = vunpack.c.l.b16 %v298
    %v338 = vunpack.c.l.b16 %v299
    %v339 = vunpack.c.l.b16 %v300
    %v340 = vunpack.c.l.b16 %v301
    %v341 = vunpack.c.l.b16 %v302
    %v342 = vunpack.c.l.b16 %v303
    %v343 = vunpack.c.l.b16 %v304
    %v344 = vunpack.c.l.b16 %v305
    %v345 = vunpack.c.l.b16 %v306
    %v346 = vunpack.c.l.b16 %v307
    %v347 = vunpack.c.l.b16 %v308
    %v348 = vunpack.c.l.b16 %v309
    %v349 = vunpack.c.l.b16 %v310
    %v350 = vunpack.c.l.b16 %v311
    %v351 = vunpack.c.l.b16 %v312
    %v352 = vpack.c.b16 %v337, %v336
    %v353 = vpack.c.b16 %v339, %v338
    %v354 = vpack.c.b16 %v341, %v340
    %v355 = vpack.c.b16 %v343, %v342
    %v356 = vpack.c.b16 %v345, %v344
    %v357 = vpack.c.b16 %v347, %v346
    %v358 = vpack.c.b16 %v349, %v348
    %v359 = vpack.c.b16 %v351, %v350
    %368 = vmatprep.subr.bf16.mxu0 0
    %369 = vmatpush1.bf16.msra.mxu0 %v359
    %370 = vmatprep.subr.bf16.mxu0 0
    %371 = vmatpush1.bf16.msra.mxu0 %v358
    %372 = vmatprep.subr.bf16.mxu0 0
    %373 = vmatpush1.bf16.msra.mxu0 %v357
    %374 = vmatprep.subr.bf16.mxu0 0
    %375 = vmatpush1.bf16.msra.mxu0 %v356
    %376 = vmatprep.subr.bf16.mxu0 0
    %377 = vmatpush1.bf16.msra.mxu0 %v355
    %378 = vmatprep.subr.bf16.mxu0 0
    %379 = vmatpush1.bf16.msra.mxu0 %v354
    %380 = vmatprep.subr.bf16.mxu0 0
    %381 = vmatpush1.bf16.msra.mxu0 %v353
    %382 = vmatprep.subr.bf16.mxu0 0
    %383 = vmatpush1.bf16.msra.mxu0 %v352
    %384 = vmatprep.subr.bf16.mxu0 0
    %385 = vmatpush2.bf16.msra.mxu0 0
    %386 = vmatprep.subr.bf16.mxu0 0
    %387 = vmatpush2.bf16.msra.mxu0 0
    %388 = vmatprep.subr.bf16.mxu0 0
    %389 = vmatpush2.bf16.msra.mxu0 0
    %390 = vmatprep.subr.bf16.mxu0 0
    %391 = vmatpush2.bf16.msra.mxu0 0
    %392 = vmatprep.subr.bf16.mxu0 0
    %393 = vmatpush2.bf16.msra.mxu0 0
    %394 = vmatprep.subr.bf16.mxu0 0
    %395 = vmatpush2.bf16.msra.mxu0 0
    %396 = vmatprep.subr.bf16.mxu0 0
    %397 = vmatpush2.bf16.msra.mxu0 0
    %398 = vmatprep.subr.bf16.mxu0 0
    %399 = vmatpush2.bf16.msra.mxu0 0
    %400 = vmatprep.mubr.bf16.mxu0 0
    %401 = vmatmul.mubr.bf16.gmra.mxu0 %v284
    %v402 = vpop.f32.mrf.mxu0
    %v403 = vadd.f32 %v318, %v402
    %v404 = vpop.f32.mrf.mxu0
    %v405 = vpop.f32.mrf.mxu0
    %v406 = vadd.f32 %v318, %v405
    %v407 = vpop.f32.mrf.mxu0
    %408 = vmatprep.mubr.bf16.mxu0 0
    %409 = vmatmul.mubr.bf16.gmra.mxu0 %v285
    %v410 = vpop.f32.mrf.mxu0
    %v411 = vadd.f32 %v318, %v410
    %v412 = vpop.f32.mrf.mxu0
    %v413 = vpop.f32.mrf.mxu0
    %v414 = vadd.f32 %v318, %v413
    %v415 = vpop.f32.mrf.mxu0
    %416 = vmatprep.mubr.bf16.mxu0 0
    %417 = vmatmul.mubr.bf16.gmra.mxu0 %v286
    %v418 = vpop.f32.mrf.mxu0
    %v419 = vadd.f32 %v318, %v418
    %v420 = vpop.f32.mrf.mxu0
    %v421 = vpop.f32.mrf.mxu0
    %v422 = vadd.f32 %v318, %v421
    %v423 = vpop.f32.mrf.mxu0
    %424 = vmatprep.mubr.bf16.mxu0 0
    %425 = vmatmul.mubr.bf16.gmra.mxu0 %v287
    %v426 = vpop.f32.mrf.mxu0
    %v427 = vadd.f32 %v318, %v426
    %v428 = vpop.f32.mrf.mxu0
    %v429 = vpop.f32.mrf.mxu0
    %v430 = vadd.f32 %v318, %v429
    %v431 = vpop.f32.mrf.mxu0
    %432 = vmatprep.mubr.bf16.mxu0 0
    %433 = vmatmul.mubr.bf16.gmra.mxu0 %v288
    %v434 = vpop.f32.mrf.mxu0
    %v435 = vadd.f32 %v318, %v434
    %v436 = vpop.f32.mrf.mxu0
    %v437 = vpop.f32.mrf.mxu0
    %v438 = vadd.f32 %v318, %v437
    %v439 = vpop.f32.mrf.mxu0
    %440 = vmatprep.mubr.bf16.mxu0 0
    %441 = vmatmul.mubr.bf16.gmra.mxu0 %v289
    %v442 = vpop.f32.mrf.mxu0
    %v443 = vadd.f32 %v318, %v442
    %v444 = vpop.f32.mrf.mxu0
    %v445 = vpop.f32.mrf.mxu0
    %v446 = vadd.f32 %v318, %v445
    %v447 = vpop.f32.mrf.mxu0
    %448 = vmatprep.mubr.bf16.mxu0 0
    %449 = vmatmul.mubr.bf16.gmra.mxu0 %v290
    %v450 = vpop.f32.mrf.mxu0
    %v451 = vadd.f32 %v318, %v450
    %v452 = vpop.f32.mrf.mxu0
    %v453 = vpop.f32.mrf.mxu0
    %v454 = vadd.f32 %v318, %v453
    %v455 = vpop.f32.mrf.mxu0
    %456 = vmatprep.mubr.bf16.mxu0 0
    %457 = vmatmul.mubr.bf16.gmra.mxu0 %v291
    %v458 = vpop.f32.mrf.mxu0
    %v459 = vadd.f32 %v318, %v458
    %v460 = vpop.f32.mrf.mxu0
    %v461 = vpop.f32.mrf.mxu0
    %v462 = vadd.f32 %v318, %v461
    %v463 = vpop.f32.mrf.mxu0
    %464 = vmatprep.mubr.bf16.mxu0 0
    %465 = vmatmul.mubr.bf16.gmra.mxu0 %v292
    %v466 = vpop.f32.mrf.mxu0
    %v467 = vadd.f32 %v318, %v466
    %v468 = vpop.f32.mrf.mxu0
    %v469 = vpop.f32.mrf.mxu0
    %v470 = vadd.f32 %v318, %v469
    %v471 = vpop.f32.mrf.mxu0
    %472 = vmatprep.mubr.bf16.mxu0 0
    %473 = vmatmul.mubr.bf16.gmra.mxu0 %v293
    %v474 = vpop.f32.mrf.mxu0
    %v475 = vadd.f32 %v318, %v474
    %v476 = vpop.f32.mrf.mxu0
    %v477 = vpop.f32.mrf.mxu0
    %v478 = vadd.f32 %v318, %v477
    %v479 = vpop.f32.mrf.mxu0
    %480 = vmatprep.mubr.bf16.mxu0 0
    %481 = vmatmul.mubr.bf16.gmra.mxu0 %v294
    %v482 = vpop.f32.mrf.mxu0
    %v483 = vadd.f32 %v318, %v482
    %v484 = vpop.f32.mrf.mxu0
    %v485 = vpop.f32.mrf.mxu0
    %v486 = vadd.f32 %v318, %v485
    %v487 = vpop.f32.mrf.mxu0
    %488 = vmatprep.mubr.bf16.mxu0 0
    %489 = vmatmul.mubr.bf16.gmra.mxu0 %v295
    %v490 = vpop.f32.mrf.mxu0
    %v491 = vadd.f32 %v318, %v490
    %v492 = vpop.f32.mrf.mxu0
    %v493 = vpop.f32.mrf.mxu0
    %v494 = vadd.f32 %v318, %v493
    %v495 = vpop.f32.mrf.mxu0
    %496 = vmatprep.mubr.bf16.mxu0 0
    %497 = vmatmul.mubr.bf16.gmra.mxu0 %v296
    %v498 = vpop.f32.mrf.mxu0
    %v499 = vadd.f32 %v318, %v498
    %v500 = vpop.f32.mrf.mxu0
    %v501 = vpop.f32.mrf.mxu0
    %v502 = vadd.f32 %v318, %v501
    %v503 = vpop.f32.mrf.mxu0
    %504 = vdwg.mxu0
    %v505 = vmax.f32 %v403, 0.0
    %v506 = vmax.f32 %v406, 0.0
    %v507 = vmax.f32 %v411, 0.0
    %v508 = vmax.f32 %v414, 0.0
    %v509 = vmax.f32 %v419, 0.0
    %v510 = vmax.f32 %v422, 0.0
    %v511 = vmax.f32 %v427, 0.0
    %v512 = vmax.f32 %v430, 0.0
    %v513 = vmax.f32 %v435, 0.0
    %v514 = vmax.f32 %v438, 0.0
    %v515 = vmax.f32 %v443, 0.0
    %v516 = vmax.f32 %v446, 0.0
    %v517 = vmax.f32 %v451, 0.0
    %v518 = vmax.f32 %v454, 0.0
    %v519 = vmax.f32 %v459, 0.0
    %v520 = vmax.f32 %v462, 0.0
    %v521 = vmax.f32 %v467, 0.0
    %v522 = vmax.f32 %v470, 0.0
    %v523 = vmax.f32 %v475, 0.0
    %v524 = vmax.f32 %v478, 0.0
    %v525 = vmax.f32 %v483, 0.0
    %v526 = vmax.f32 %v486, 0.0
    %v527 = vmax.f32 %v491, 0.0
    %v528 = vmax.f32 %v494, 0.0
    %v529 = vmax.f32 %v499, 0.0
    %v530 = vmax.f32 %v502, 0.0
    %v531 = vpack.c.bf16 %v506, %v505
    %v532 = vpack.c.bf16 %v508, %v507
    %v533 = vpack.c.bf16 %v510, %v509
    %v534 = vpack.c.bf16 %v512, %v511
    %v535 = vpack.c.bf16 %v514, %v513
    %v536 = vpack.c.bf16 %v516, %v515
    %v537 = vpack.c.bf16 %v518, %v517
    %v538 = vpack.c.bf16 %v520, %v519
    %v539 = vpack.c.bf16 %v522, %v521
    %v540 = vpack.c.bf16 %v524, %v523
    %v541 = vpack.c.bf16 %v526, %v525
    %v542 = vpack.c.bf16 %v528, %v527
    %v543 = vpack.c.bf16 %v530, %v529
    %v544 = vld [vmem:[%s5] sm:$0xf]
    %v545 = vld [vmem:[%s5 + $0x4] sm:$0xf]
    %v546 = vld [vmem:[%s5 + $0x8] sm:$0xf]
    %v547 = vld [vmem:[%s5 + $0xc] sm:$0xf]
    %v548 = vld [vmem:[%s5 + $0x10] sm:$0xf]
    %v549 = vld [vmem:[%s5 + $0x14] sm:$0xf]
    %v550 = vld [vmem:[%s5 + $0x18] sm:$0xf]
    %v551 = vld [vmem:[%s5 + $0x1c] sm:$0xf]
    %v552 = vld [vmem:[%s5 + $0x20] sm:$0xf]
    %v553 = vld [vmem:[%s5 + $0x24] sm:$0xf]
    %v554 = vld [vmem:[%s5 + $0x28] sm:$0xf]
    %v555 = vld [vmem:[%s5 + $0x2c] sm:$0xf]
    %v556 = vld [vmem:[%s5 + $0x30] sm:$0xf]
    %v557 = vld [vmem:[%s5 + $0x34] sm:$0xf]
    %v558 = vld [vmem:[%s5 + $0x38] sm:$0xf]
    %v559 = vld [vmem:[%s5 + $0x3c] sm:$0xf]
    %v560 = vld [vmem:[%s6] sm:$0x1]
    %v562 = vlaneseq
    %v563 = vshrl.u32 %v562, 7
    %v564 = vsub.s32 0, %v563
    %v565 = vrot.slane %v560, %v564
    %v583 = vunpack.c.l.b16 %v544
    %v584 = vunpack.c.l.b16 %v545
    %v585 = vunpack.c.l.b16 %v546
    %v586 = vunpack.c.l.b16 %v547
    %v587 = vunpack.c.l.b16 %v548
    %v588 = vunpack.c.l.b16 %v549
    %v589 = vunpack.c.l.b16 %v550
    %v590 = vunpack.c.l.b16 %v551
    %v591 = vunpack.c.l.b16 %v552
    %v592 = vunpack.c.l.b16 %v553
    %v593 = vunpack.c.l.b16 %v554
    %v594 = vunpack.c.l.b16 %v555
    %v595 = vunpack.c.l.b16 %v556
    %v596 = vunpack.c.l.b16 %v557
    %v597 = vunpack.c.l.b16 %v558
    %v598 = vunpack.c.l.b16 %v559
    %v599 = vpack.c.b16 %v584, %v583
    %v600 = vpack.c.b16 %v586, %v585
    %v601 = vpack.c.b16 %v588, %v587
    %v602 = vpack.c.b16 %v590, %v589
    %v603 = vpack.c.b16 %v592, %v591
    %v604 = vpack.c.b16 %v594, %v593
    %v605 = vpack.c.b16 %v596, %v595
    %v606 = vpack.c.b16 %v598, %v597
    %615 = vmatprep.subr.bf16.mxu0 0
    %616 = vmatpush1.bf16.msra.mxu0 %v606
    %617 = vmatprep.subr.bf16.mxu0 0
    %618 = vmatpush1.bf16.msra.mxu0 %v605
    %619 = vmatprep.subr.bf16.mxu0 0
    %620 = vmatpush1.bf16.msra.mxu0 %v604
    %621 = vmatprep.subr.bf16.mxu0 0
    %622 = vmatpush1.bf16.msra.mxu0 %v603
    %623 = vmatprep.subr.bf16.mxu0 0
    %624 = vmatpush1.bf16.msra.mxu0 %v602
    %625 = vmatprep.subr.bf16.mxu0 0
    %626 = vmatpush1.bf16.msra.mxu0 %v601
    %627 = vmatprep.subr.bf16.mxu0 0
    %628 = vmatpush1.bf16.msra.mxu0 %v600
    %629 = vmatprep.subr.bf16.mxu0 0
    %630 = vmatpush1.bf16.msra.mxu0 %v599
    %631 = vmatprep.subr.bf16.mxu0 0
    %632 = vmatpush2.bf16.msra.mxu0 0
    %633 = vmatprep.subr.bf16.mxu0 0
    %634 = vmatpush2.bf16.msra.mxu0 0
    %635 = vmatprep.subr.bf16.mxu0 0
    %636 = vmatpush2.bf16.msra.mxu0 0
    %637 = vmatprep.subr.bf16.mxu0 0
    %638 = vmatpush2.bf16.msra.mxu0 0
    %639 = vmatprep.subr.bf16.mxu0 0
    %640 = vmatpush2.bf16.msra.mxu0 0
    %641 = vmatprep.subr.bf16.mxu0 0
    %642 = vmatpush2.bf16.msra.mxu0 0
    %643 = vmatprep.subr.bf16.mxu0 0
    %644 = vmatpush2.bf16.msra.mxu0 0
    %645 = vmatprep.subr.bf16.mxu0 0
    %646 = vmatpush2.bf16.msra.mxu0 0
    %647 = vmatprep.mubr.bf16.mxu0 0
    %648 = vmatmul.mubr.bf16.gmra.mxu0 %v531
    %v649 = vpop.f32.mrf.mxu0
    %v650 = vadd.f32 %v565, %v649
    %v651 = vpop.f32.mrf.mxu0
    %v652 = vpop.f32.mrf.mxu0
    %v653 = vadd.f32 %v565, %v652
    %v654 = vpop.f32.mrf.mxu0
    %655 = vmatprep.mubr.bf16.mxu0 0
    %656 = vmatmul.mubr.bf16.gmra.mxu0 %v532
    %v657 = vpop.f32.mrf.mxu0
    %v658 = vadd.f32 %v565, %v657
    %v659 = vpop.f32.mrf.mxu0
    %v660 = vpop.f32.mrf.mxu0
    %v661 = vadd.f32 %v565, %v660
    %v662 = vpop.f32.mrf.mxu0
    %663 = vmatprep.mubr.bf16.mxu0 0
    %664 = vmatmul.mubr.bf16.gmra.mxu0 %v533
    %v665 = vpop.f32.mrf.mxu0
    %v666 = vadd.f32 %v565, %v665
    %v667 = vpop.f32.mrf.mxu0
    %v668 = vpop.f32.mrf.mxu0
    %v669 = vadd.f32 %v565, %v668
    %v670 = vpop.f32.mrf.mxu0
    %671 = vmatprep.mubr.bf16.mxu0 0
    %672 = vmatmul.mubr.bf16.gmra.mxu0 %v534
    %v673 = vpop.f32.mrf.mxu0
    %v674 = vadd.f32 %v565, %v673
    %v675 = vpop.f32.mrf.mxu0
    %v676 = vpop.f32.mrf.mxu0
    %v677 = vadd.f32 %v565, %v676
    %v678 = vpop.f32.mrf.mxu0
    %679 = vmatprep.mubr.bf16.mxu0 0
    %680 = vmatmul.mubr.bf16.gmra.mxu0 %v535
    %v681 = vpop.f32.mrf.mxu0
    %v682 = vadd.f32 %v565, %v681
    %v683 = vpop.f32.mrf.mxu0
    %v684 = vpop.f32.mrf.mxu0
    %v685 = vadd.f32 %v565, %v684
    %v686 = vpop.f32.mrf.mxu0
    %687 = vmatprep.mubr.bf16.mxu0 0
    %688 = vmatmul.mubr.bf16.gmra.mxu0 %v536
    %v689 = vpop.f32.mrf.mxu0
    %v690 = vadd.f32 %v565, %v689
    %v691 = vpop.f32.mrf.mxu0
    %v692 = vpop.f32.mrf.mxu0
    %v693 = vadd.f32 %v565, %v692
    %v694 = vpop.f32.mrf.mxu0
    %695 = vmatprep.mubr.bf16.mxu0 0
    %696 = vmatmul.mubr.bf16.gmra.mxu0 %v537
    %v697 = vpop.f32.mrf.mxu0
    %v698 = vadd.f32 %v565, %v697
    %v699 = vpop.f32.mrf.mxu0
    %v700 = vpop.f32.mrf.mxu0
    %v701 = vadd.f32 %v565, %v700
    %v702 = vpop.f32.mrf.mxu0
    %703 = vmatprep.mubr.bf16.mxu0 0
    %704 = vmatmul.mubr.bf16.gmra.mxu0 %v538
    %v705 = vpop.f32.mrf.mxu0
    %v706 = vadd.f32 %v565, %v705
    %v707 = vpop.f32.mrf.mxu0
    %v708 = vpop.f32.mrf.mxu0
    %v709 = vadd.f32 %v565, %v708
    %v710 = vpop.f32.mrf.mxu0
    %711 = vmatprep.mubr.bf16.mxu0 0
    %712 = vmatmul.mubr.bf16.gmra.mxu0 %v539
    %v713 = vpop.f32.mrf.mxu0
    %v714 = vadd.f32 %v565, %v713
    %v715 = vpop.f32.mrf.mxu0
    %v716 = vpop.f32.mrf.mxu0
    %v717 = vadd.f32 %v565, %v716
    %v718 = vpop.f32.mrf.mxu0
    %719 = vmatprep.mubr.bf16.mxu0 0
    %720 = vmatmul.mubr.bf16.gmra.mxu0 %v540
    %v721 = vpop.f32.mrf.mxu0
    %v722 = vadd.f32 %v565, %v721
    %v723 = vpop.f32.mrf.mxu0
    %v724 = vpop.f32.mrf.mxu0
    %v725 = vadd.f32 %v565, %v724
    %v726 = vpop.f32.mrf.mxu0
    %727 = vmatprep.mubr.bf16.mxu0 0
    %728 = vmatmul.mubr.bf16.gmra.mxu0 %v541
    %v729 = vpop.f32.mrf.mxu0
    %v730 = vadd.f32 %v565, %v729
    %v731 = vpop.f32.mrf.mxu0
    %v732 = vpop.f32.mrf.mxu0
    %v733 = vadd.f32 %v565, %v732
    %v734 = vpop.f32.mrf.mxu0
    %735 = vmatprep.mubr.bf16.mxu0 0
    %736 = vmatmul.mubr.bf16.gmra.mxu0 %v542
    %v737 = vpop.f32.mrf.mxu0
    %v738 = vadd.f32 %v565, %v737
    %v739 = vpop.f32.mrf.mxu0
    %v740 = vpop.f32.mrf.mxu0
    %v741 = vadd.f32 %v565, %v740
    %v742 = vpop.f32.mrf.mxu0
    %743 = vmatprep.mubr.bf16.mxu0 0
    %744 = vmatmul.mubr.bf16.gmra.mxu0 %v543
    %v745 = vpop.f32.mrf.mxu0
    %v746 = vadd.f32 %v565, %v745
    %v747 = vpop.f32.mrf.mxu0
    %v748 = vpop.f32.mrf.mxu0
    %v749 = vadd.f32 %v565, %v748
    %v750 = vpop.f32.mrf.mxu0
    %751 = vdwg.mxu0
    %v752 = vmax.f32 %v650, 0.0
    %v753 = vmax.f32 %v653, 0.0
    %v754 = vmax.f32 %v658, 0.0
    %v755 = vmax.f32 %v661, 0.0
    %v756 = vmax.f32 %v666, 0.0
    %v757 = vmax.f32 %v669, 0.0
    %v758 = vmax.f32 %v674, 0.0
    %v759 = vmax.f32 %v677, 0.0
    %v760 = vmax.f32 %v682, 0.0
    %v761 = vmax.f32 %v685, 0.0
    %v762 = vmax.f32 %v690, 0.0
    %v763 = vmax.f32 %v693, 0.0
    %v764 = vmax.f32 %v698, 0.0
    %v765 = vmax.f32 %v701, 0.0
    %v766 = vmax.f32 %v706, 0.0
    %v767 = vmax.f32 %v709, 0.0
    %v768 = vmax.f32 %v714, 0.0
    %v769 = vmax.f32 %v717, 0.0
    %v770 = vmax.f32 %v722, 0.0
    %v771 = vmax.f32 %v725, 0.0
    %v772 = vmax.f32 %v730, 0.0
    %v773 = vmax.f32 %v733, 0.0
    %v774 = vmax.f32 %v738, 0.0
    %v775 = vmax.f32 %v741, 0.0
    %v776 = vmax.f32 %v746, 0.0
    %v777 = vmax.f32 %v749, 0.0
    %vm778 = vcmask 261120
    %779 = vst.msk [vmem:[#allocation2] sm:$0xff] %vm778, %v752
    %780 = vst.msk [vmem:[#allocation2 + $0x8] sm:$0xff] %vm778, %v753
    %781 = vst.msk [vmem:[#allocation2 + $0x10] sm:$0xff] %vm778, %v754
    %782 = vst.msk [vmem:[#allocation2 + $0x18] sm:$0xff] %vm778, %v755
    %783 = vst.msk [vmem:[#allocation2 + $0x20] sm:$0xff] %vm778, %v756
    %784 = vst.msk [vmem:[#allocation2 + $0x28] sm:$0xff] %vm778, %v757
    %785 = vst.msk [vmem:[#allocation2 + $0x30] sm:$0xff] %vm778, %v758
    %786 = vst.msk [vmem:[#allocation2 + $0x38] sm:$0xff] %vm778, %v759
    %787 = vst.msk [vmem:[#allocation2 + $0x40] sm:$0xff] %vm778, %v760
    %788 = vst.msk [vmem:[#allocation2 + $0x48] sm:$0xff] %vm778, %v761
    %789 = vst.msk [vmem:[#allocation2 + $0x50] sm:$0xff] %vm778, %v762
    %790 = vst.msk [vmem:[#allocation2 + $0x58] sm:$0xff] %vm778, %v763
    %791 = vst.msk [vmem:[#allocation2 + $0x60] sm:$0xff] %vm778, %v764
    %792 = vst.msk [vmem:[#allocation2 + $0x68] sm:$0xff] %vm778, %v765
    %793 = vst.msk [vmem:[#allocation2 + $0x70] sm:$0xff] %vm778, %v766
    %794 = vst.msk [vmem:[#allocation2 + $0x78] sm:$0xff] %vm778, %v767
    %795 = vst.msk [vmem:[#allocation2 + $0x80] sm:$0xff] %vm778, %v768
    %796 = vst.msk [vmem:[#allocation2 + $0x88] sm:$0xff] %vm778, %v769
    %797 = vst.msk [vmem:[#allocation2 + $0x90] sm:$0xff] %vm778, %v770
    %798 = vst.msk [vmem:[#allocation2 + $0x98] sm:$0xff] %vm778, %v771
    %799 = vst.msk [vmem:[#allocation2 + $0xa0] sm:$0xff] %vm778, %v772
    %800 = vst.msk [vmem:[#allocation2 + $0xa8] sm:$0xff] %vm778, %v773
    %801 = vst.msk [vmem:[#allocation2 + $0xb0] sm:$0xff] %vm778, %v774
    %802 = vst.msk [vmem:[#allocation2 + $0xb8] sm:$0xff] %vm778, %v775
    %803 = vst.msk [vmem:[#allocation2 + $0xc0] sm:$0xff] %vm778, %v776
    %804 = vst.msk [vmem:[#allocation2 + $0xc8] sm:$0xff] %vm778, %v777
    // Predicated region
    $region30: #{tpu_custom_call.1} parent=1 // pred_check
      _
    $region31: #{tpu_custom_call.1} parent=1 // pred_check_branch
      %806 = sbr.rel (0) target = $region33
    $region32: #{tpu_custom_call.1} parent=1 // pred_region
      // Predicated region
      $region34: #{tpu_custom_call.1} parent=32 // pred_check
        _
      $region35: #{tpu_custom_call.1} parent=32 // pred_check_branch
        %808 = sbr.rel (0) target = $region37
      $region36: #{tpu_custom_call.1} parent=32 // pred_region
        // Predicated region
        $region38: #{tpu_custom_call.1} parent=36 // pred_check
          _
        $region39: #{tpu_custom_call.1} parent=36 // pred_check_branch
          %810 = sbr.rel (0) target = $region41
        $region40: #{tpu_custom_call.1} parent=36 // pred_region
          // Predicated region
          $region53: #{tpu_custom_call.1} parent=40 // pred_check
            _
          $region54: #{tpu_custom_call.1} parent=40 // pred_check_branch
            %874 = sbr.rel (0) target = $region56
          $region55: #{tpu_custom_call.1} parent=40 // pred_region
            loop: start=0, step=1, limit=1
            $region57: #{tpu_custom_call.1} parent=55 // loop_pre_header
              _
            $region58: #{tpu_custom_call.1} parent=55 // loop_header
              %s876 = sphi 0, %s880
              %p877 = scmp.ge.s32.totalorder %s876, 1
              %s881 = sphi [#allocation2], [#allocation2]
              %s882 = sphi %s7, %s7
            $region59: #{tpu_custom_call.1} parent=55 // loop_header_branch
              %879 = sbr.rel (%p877) target = $region63
            $region60: #{tpu_custom_call.1} parent=55 // loop_body
              %v883 = vld [vmem:[%s881] sm:$0xff]
              %884 = vst [vmem:[%s882] sm:$0xff] %v883
              %v885 = vld [vmem:[%s881 + $0x8] sm:$0xff]
              %886 = vst [vmem:[%s882 + $0x8] sm:$0xff] %v885
              %v887 = vld [vmem:[%s881 + $0x10] sm:$0xff]
              %888 = vst [vmem:[%s882 + $0x10] sm:$0xff] %v887
              %v889 = vld [vmem:[%s881 + $0x18] sm:$0xff]
              %890 = vst [vmem:[%s882 + $0x18] sm:$0xff] %v889
              %v891 = vld [vmem:[%s881 + $0x20] sm:$0xff]
              %892 = vst [vmem:[%s882 + $0x20] sm:$0xff] %v891
              %v893 = vld [vmem:[%s881 + $0x28] sm:$0xff]
              %894 = vst [vmem:[%s882 + $0x28] sm:$0xff] %v893
              %v895 = vld [vmem:[%s881 + $0x30] sm:$0xff]
              %896 = vst [vmem:[%s882 + $0x30] sm:$0xff] %v895
              %v897 = vld [vmem:[%s881 + $0x38] sm:$0xff]
              %898 = vst [vmem:[%s882 + $0x38] sm:$0xff] %v897
              %v899 = vld [vmem:[%s881 + $0x40] sm:$0xff]
              %900 = vst [vmem:[%s882 + $0x40] sm:$0xff] %v899
              %v901 = vld [vmem:[%s881 + $0x48] sm:$0xff]
              %902 = vst [vmem:[%s882 + $0x48] sm:$0xff] %v901
              %v903 = vld [vmem:[%s881 + $0x50] sm:$0xff]
              %904 = vst [vmem:[%s882 + $0x50] sm:$0xff] %v903
              %v905 = vld [vmem:[%s881 + $0x58] sm:$0xff]
              %906 = vst [vmem:[%s882 + $0x58] sm:$0xff] %v905
              %v907 = vld [vmem:[%s881 + $0x60] sm:$0xff]
              %908 = vst [vmem:[%s882 + $0x60] sm:$0xff] %v907
              %v909 = vld [vmem:[%s881 + $0x68] sm:$0xff]
              %910 = vst [vmem:[%s882 + $0x68] sm:$0xff] %v909
              %v911 = vld [vmem:[%s881 + $0x70] sm:$0xff]
              %912 = vst [vmem:[%s882 + $0x70] sm:$0xff] %v911
              %v913 = vld [vmem:[%s881 + $0x78] sm:$0xff]
              %914 = vst [vmem:[%s882 + $0x78] sm:$0xff] %v913
              %v915 = vld [vmem:[%s881 + $0x80] sm:$0xff]
              %916 = vst [vmem:[%s882 + $0x80] sm:$0xff] %v915
              %v917 = vld [vmem:[%s881 + $0x88] sm:$0xff]
              %918 = vst [vmem:[%s882 + $0x88] sm:$0xff] %v917
              %v919 = vld [vmem:[%s881 + $0x90] sm:$0xff]
              %920 = vst [vmem:[%s882 + $0x90] sm:$0xff] %v919
              %v921 = vld [vmem:[%s881 + $0x98] sm:$0xff]
              %922 = vst [vmem:[%s882 + $0x98] sm:$0xff] %v921
              %v923 = vld [vmem:[%s881 + $0xa0] sm:$0xff]
              %924 = vst [vmem:[%s882 + $0xa0] sm:$0xff] %v923
              %v925 = vld [vmem:[%s881 + $0xa8] sm:$0xff]
              %926 = vst [vmem:[%s882 + $0xa8] sm:$0xff] %v925
              %v927 = vld [vmem:[%s881 + $0xb0] sm:$0xff]
              %928 = vst [vmem:[%s882 + $0xb0] sm:$0xff] %v927
              %v929 = vld [vmem:[%s881 + $0xb8] sm:$0xff]
              %930 = vst [vmem:[%s882 + $0xb8] sm:$0xff] %v929
              %v931 = vld [vmem:[%s881 + $0xc0] sm:$0xff]
              %932 = vst [vmem:[%s882 + $0xc0] sm:$0xff] %v931
            $region61: #{tpu_custom_call.1} parent=55 // loop_footer
              %s880 = sadd.s32 1, %s876
            $region62: #{tpu_custom_call.1} parent=55 // loop_footer_branch
              %875 = sbr.rel target = $region58
            $region63: #{tpu_custom_call.1} parent=55 // loop_exit
              _
          $region56: #{tpu_custom_call.1} parent=40 // pred_fallthru
            _
          // Predicated region
          $region64: #{tpu_custom_call.1} parent=40 // pred_check
            _
          $region65: #{tpu_custom_call.1} parent=40 // pred_check_branch
            %934 = sbr.rel target = $region67
          $region66: #{tpu_custom_call.1} parent=40 // pred_region
            _
          $region67: #{tpu_custom_call.1} parent=40 // pred_fallthru
            _
        $region41: #{tpu_custom_call.1} parent=36 // pred_fallthru
          _
        // Predicated region
        $region42: #{tpu_custom_call.1} parent=36 // pred_check
          _
        $region43: #{tpu_custom_call.1} parent=36 // pred_check_branch
          %812 = sbr.rel target = $region45
        $region44: #{tpu_custom_call.1} parent=36 // pred_region
          %s814 = ssub.s32 256, 1
          loop: start=0, step=1, limit=1
          $region46: #{tpu_custom_call.1} parent=44 // loop_pre_header
            _
          $region47: #{tpu_custom_call.1} parent=44 // loop_header
            %s816 = sphi 0, %s820
            %p817 = scmp.ge.s32.totalorder %s816, 1
            %s821 = sphi [#allocation2], [#allocation2]
            %s822 = sphi %s7, %s7
          $region48: #{tpu_custom_call.1} parent=44 // loop_header_branch
            %819 = sbr.rel (%p817) target = $region52
          $region49: #{tpu_custom_call.1} parent=44 // loop_body
            %v823 = vld [vmem:[%s821] sm:%s814]
            %824 = vst [vmem:[%s822] sm:%s814] %v823
            %v825 = vld [vmem:[%s821 + $0x8] sm:%s814]
            %826 = vst [vmem:[%s822 + $0x8] sm:%s814] %v825
            %v827 = vld [vmem:[%s821 + $0x10] sm:%s814]
            %828 = vst [vmem:[%s822 + $0x10] sm:%s814] %v827
            %v829 = vld [vmem:[%s821 + $0x18] sm:%s814]
            %830 = vst [vmem:[%s822 + $0x18] sm:%s814] %v829
            %v831 = vld [vmem:[%s821 + $0x20] sm:%s814]
            %832 = vst [vmem:[%s822 + $0x20] sm:%s814] %v831
            %v833 = vld [vmem:[%s821 + $0x28] sm:%s814]
            %834 = vst [vmem:[%s822 + $0x28] sm:%s814] %v833
            %v835 = vld [vmem:[%s821 + $0x30] sm:%s814]
            %836 = vst [vmem:[%s822 + $0x30] sm:%s814] %v835
            %v837 = vld [vmem:[%s821 + $0x38] sm:%s814]
            %838 = vst [vmem:[%s822 + $0x38] sm:%s814] %v837
            %v839 = vld [vmem:[%s821 + $0x40] sm:%s814]
            %840 = vst [vmem:[%s822 + $0x40] sm:%s814] %v839
            %v841 = vld [vmem:[%s821 + $0x48] sm:%s814]
            %842 = vst [vmem:[%s822 + $0x48] sm:%s814] %v841
            %v843 = vld [vmem:[%s821 + $0x50] sm:%s814]
            %844 = vst [vmem:[%s822 + $0x50] sm:%s814] %v843
            %v845 = vld [vmem:[%s821 + $0x58] sm:%s814]
            %846 = vst [vmem:[%s822 + $0x58] sm:%s814] %v845
            %v847 = vld [vmem:[%s821 + $0x60] sm:%s814]
            %848 = vst [vmem:[%s822 + $0x60] sm:%s814] %v847
            %v849 = vld [vmem:[%s821 + $0x68] sm:%s814]
            %850 = vst [vmem:[%s822 + $0x68] sm:%s814] %v849
            %v851 = vld [vmem:[%s821 + $0x70] sm:%s814]
            %852 = vst [vmem:[%s822 + $0x70] sm:%s814] %v851
            %v853 = vld [vmem:[%s821 + $0x78] sm:%s814]
            %854 = vst [vmem:[%s822 + $0x78] sm:%s814] %v853
            %v855 = vld [vmem:[%s821 + $0x80] sm:%s814]
            %856 = vst [vmem:[%s822 + $0x80] sm:%s814] %v855
            %v857 = vld [vmem:[%s821 + $0x88] sm:%s814]
            %858 = vst [vmem:[%s822 + $0x88] sm:%s814] %v857
            %v859 = vld [vmem:[%s821 + $0x90] sm:%s814]
            %860 = vst [vmem:[%s822 + $0x90] sm:%s814] %v859
            %v861 = vld [vmem:[%s821 + $0x98] sm:%s814]
            %862 = vst [vmem:[%s822 + $0x98] sm:%s814] %v861
            %v863 = vld [vmem:[%s821 + $0xa0] sm:%s814]
            %864 = vst [vmem:[%s822 + $0xa0] sm:%s814] %v863
            %v865 = vld [vmem:[%s821 + $0xa8] sm:%s814]
            %866 = vst [vmem:[%s822 + $0xa8] sm:%s814] %v865
            %v867 = vld [vmem:[%s821 + $0xb0] sm:%s814]
            %868 = vst [vmem:[%s822 + $0xb0] sm:%s814] %v867
            %v869 = vld [vmem:[%s821 + $0xb8] sm:%s814]
            %870 = vst [vmem:[%s822 + $0xb8] sm:%s814] %v869
            %v871 = vld [vmem:[%s821 + $0xc0] sm:%s814]
            %872 = vst [vmem:[%s822 + $0xc0] sm:%s814] %v871
          $region50: #{tpu_custom_call.1} parent=44 // loop_footer
            %s820 = sadd.s32 1, %s816
          $region51: #{tpu_custom_call.1} parent=44 // loop_footer_branch
            %815 = sbr.rel target = $region47
          $region52: #{tpu_custom_call.1} parent=44 // loop_exit
            _
        $region45: #{tpu_custom_call.1} parent=36 // pred_fallthru
          _
      $region37: #{tpu_custom_call.1} parent=32 // pred_fallthru
        _
      %935 = vnop
    $region33: #{tpu_custom_call.1} parent=1 // pred_fallthru
      _
    // Predicated region
    $region68: #{tpu_custom_call.1} parent=1 // pred_check
      _
    $region69: #{tpu_custom_call.1} parent=1 // pred_check_branch
      %937 = sbr.rel (0) target = $region71
    $region70: #{tpu_custom_call.1} parent=1 // pred_region
      _
    $region71: #{tpu_custom_call.1} parent=1 // pred_fallthru
      _

</llo_original>
